<compile_context>
chip_gen: v5e
topology: v5e:2x2
jax: 0.10.0
libtpu: 0.0.40
codegen_flags: <defaults>
</compile_context>

<pallas_src>
import functools
import math

import jax
import jax.numpy as jnp
from jax.experimental import pallas as pl
from jax.experimental.pallas import tpu as pltpu


def _gelu_tanh(x):
    c = 0.7978845608028654  # sqrt(2/pi)
    return 0.5 * x * (1.0 + jnp.tanh(c * (x + 0.044715 * x * x * x)))


def _vmem_capacity_bytes():
    try:
        return int(pltpu.get_tpu_info().vmem_capacity_bytes)
    except Exception:
        return 64 << 20  # conservative: v7x physical VMEM per TensorCore


def _lane_chunk_sum(x, *, max_unroll=32):
    """Sum over the last (lane) axis.

    When the last dim is a multiple of 128 (and the unroll stays small) the
    128-wide lane chunks are first added elementwise on the VPU; only the
    final 128-wide slab goes through a cross-lane (XLU) reduce."""
    n = x.shape[-1]
    if n % 128 == 0 and 1 < n // 128 <= max_unroll:
        acc = x[..., 0:128]
        for k in range(1, n // 128):
            acc = acc + x[..., k * 128:(k + 1) * 128]
        return jnp.sum(acc, axis=-1)
    return jnp.sum(x, axis=-1)


# ---------------- primary path: fused pool + FC + sigmoid + scale ------------
def _se_fused_kernel(x_ref, w1_ref, w2_ref, o_ref, *, inv_hw):
    x = x_ref[...].astype(jnp.float32)                         # (Bt, C, HW)
    pooled = _lane_chunk_sum(x) * inv_hw                       # (Bt, C)

    # Two tiny bias-free FCs as VPU broadcast-multiply-reduce (no MXU padding).
    w1 = w1_ref[...].astype(jnp.float32)                       # (CM, C)
    w2 = w2_ref[...].astype(jnp.float32)                       # (C, CM)
    h = jnp.sum(pooled[:, None, :] * w1[None, :, :], axis=-1)  # (Bt, CM)
    h = _gelu_tanh(h)
    g = jnp.sum(h[:, None, :] * w2[None, :, :], axis=-1)       # (Bt, C)
    s = jax.nn.sigmoid(g)                                      # (Bt, C)

    o_ref[...] = (x * s[:, :, None]).astype(o_ref.dtype)


# ---------------- fallback kernel 1: tiled global avg-pool + FC --------------
def _se_pool_fc_kernel(x_ref, w1t_ref, w2_ref, s_ref, sum_ref, *,
                       inv_hw, lane_chunks):
    t = pl.program_id(1)

    @pl.when(t == 0)
    def _():
        sum_ref[...] = jnp.zeros_like(sum_ref)

    x = x_ref[0].astype(jnp.float32)                           # (C, thw)
    if lane_chunks is not None:
        # VPU adds of aligned 128-lane chunks into a (C, 128) accumulator.
        partial = x[:, 0:128]
        for k in range(1, lane_chunks):
            partial = partial + x[:, k * 128:(k + 1) * 128]
        sum_ref[...] += partial
    else:
        # Ragged / very wide tile: plain reduce into column 0 of the scratch.
        sum_ref[:, 0:1] += jnp.sum(x, axis=1, keepdims=True)

    @pl.when(t == pl.num_programs(1) - 1)
    def _():
        mean = jnp.sum(sum_ref[...], axis=1, keepdims=True) * inv_hw   # (C, 1)
        # MXU-free FCs: w1t is fc1_w.T (C, CM); w2 is fc2_w (C, CM).
        w1t = w1t_ref[...].astype(jnp.float32)
        w2 = w2_ref[...].astype(jnp.float32)
        h = jnp.sum(w1t * mean, axis=0, keepdims=True)                 # (1, CM)
        h = _gelu_tanh(h)
        g = jnp.sum(w2 * h, axis=1, keepdims=True)                     # (C, 1)
        s_ref[0] = jax.nn.sigmoid(g).astype(s_ref.dtype)


# ---------------- fallback kernel 2: out = x * s ------------------------------
def _se_scale_kernel(x_ref, s_ref, o_ref):
    o_ref[0] = (x_ref[0] * s_ref[0]).astype(o_ref.dtype)


# ------------------------------- wrapper --------------------------------------
def _largest_divisor_leq(n, cap):
    cap = max(1, min(n, int(cap)))
    for d in range(cap, 0, -1):
        if n % d == 0:
            return d
    return 1


def _pick_hw_tile(HW, C, dtype_bytes, target_bytes):
    """Spatial tile for the 2-pass fallback: a multiple of 128 that divides HW,
    sized so one (C, thw) block is roughly target_bytes."""
    if HW % 128 != 0 or HW <= 128:
        return HW
    thw = max(128, min(HW, (target_bytes // (C * dtype_bytes)) // 128 * 128))
    while HW % thw != 0:
        thw -= 128
    return max(thw, 128)


def se_forward(x, fc1_w, fc2_w, *,
               target_block_bytes=2 << 20,
               max_block_bytes=6 << 20,
               force_two_pass=False,
               donate_input=False):
    """SE block.  x: (B, C, H, W) NCHW.  fc1_w: (CM, C), fc2_w: (C, CM)."""
    B, C, H, W = x.shape
    HW = H * W
    CM = fc1_w.shape[0]
    assert fc1_w.shape == (CM, C) and fc2_w.shape == (C, CM)

    x3 = x.reshape(B, C, HW)
    dtype_bytes = x.dtype.itemsize
    inv_hw = 1.0 / float(HW)

    vmem_cap = _vmem_capacity_bytes()
    # 2 input + 2 output pipeline buffers must fit with margin (v7x: 64 MiB).
    max_block_bytes = min(max_block_bytes,
                          max(256 << 10, (vmem_cap - (16 << 20)) // 8))
    per_image_bytes = C * HW * dtype_bytes
    io_aliases = {0: 0} if donate_input else {}

    if (not force_two_pass) and per_image_bytes <= max_block_bytes:
        # -------- fused single-pass: x read once, written once --------------
        bt_cap = max(1, min(max_block_bytes, target_block_bytes) // per_image_bytes)
        bt = _largest_divisor_leq(B, bt_cap)
        # Keep >= 2 grid steps for v7x's two TensorCores when blocks stay big.
        if B >= 2 and bt == B and B % 2 == 0 and \
                (B // 2) * per_image_bytes >= (512 << 10):
            bt = B // 2
        block_bytes = bt * per_image_bytes
        vmem_limit = int(min(vmem_cap * 3 // 4,
                             max(32 << 20, 4 * block_bytes + (8 << 20))))

        kernel = functools.partial(_se_fused_kernel, inv_hw=inv_hw)
        out = pl.pallas_call(
            kernel,
            out_shape=jax.ShapeDtypeStruct((B, C, HW), x.dtype),
            grid_spec=pltpu.PrefetchScalarGridSpec(
                num_scalar_prefetch=0,
                grid=(B // bt,),
                in_specs=[
                    pl.BlockSpec((bt, C, HW), lambda i: (i, 0, 0)),
                    pl.BlockSpec((CM, C), lambda i: (0, 0)),
                    pl.BlockSpec((C, CM), lambda i: (0, 0)),
                ],
                out_specs=pl.BlockSpec((bt, C, HW), lambda i: (i, 0, 0)),
            ),
            compiler_params=pltpu.CompilerParams(
                dimension_semantics=("parallel",),
                vmem_limit_bytes=vmem_limit),
            input_output_aliases=io_aliases,
        )(x3, fc1_w, fc2_w)
        return out.reshape(B, C, H, W)

    # -------- 2-pass fallback: per-image block too large for one VMEM tile ---
    thw = _pick_hw_tile(HW, C, dtype_bytes,
                        min(target_block_bytes, max_block_bytes))
    t_hw = HW // thw
    lane_chunks = thw // 128 if (thw % 128 == 0 and thw // 128 <= 32) else None
    tile_bytes = C * thw * dtype_bytes
    vmem_limit = int(min(vmem_cap * 3 // 4,
                         max(32 << 20, 4 * tile_bytes + (8 << 20))))

    # TODO(synk): at B == 1 this pool pass only occupies one v7x TensorCore; a
    # leading size-2 "parallel" split of the HW reduction would fix that.
    kernel1 = functools.partial(_se_pool_fc_kernel, inv_hw=inv_hw,
                                lane_chunks=lane_chunks)
    s = pl.pallas_call(
        kernel1,
        out_shape=jax.ShapeDtypeStruct((B, C, 1), jnp.float32),
        grid_spec=pltpu.PrefetchScalarGridSpec(
            num_scalar_prefetch=0,
            grid=(B, t_hw),
            in_specs=[
                pl.BlockSpec((1, C, thw), lambda b, t: (b, 0, t)),
                pl.BlockSpec((C, CM), lambda b, t: (0, 0)),   # fc1_w.T
                pl.BlockSpec((C, CM), lambda b, t: (0, 0)),   # fc2_w
            ],
            out_specs=pl.BlockSpec((1, C, 1), lambda b, t: (b, 0, 0)),
            scratch_shapes=[pltpu.VMEM((C, 128), jnp.float32)],
        ),
        compiler_params=pltpu.CompilerParams(
            dimension_semantics=("parallel", "arbitrary"),
            vmem_limit_bytes=vmem_limit),
    )(x3, fc1_w.T, fc2_w)

    out = pl.pallas_call(
        _se_scale_kernel,
        out_shape=jax.ShapeDtypeStruct((B, C, HW), x.dtype),
        grid_spec=pltpu.PrefetchScalarGridSpec(
            num_scalar_prefetch=0,
            grid=(B, t_hw),
            in_specs=[
                pl.BlockSpec((1, C, thw), lambda b, t: (b, 0, t)),
                pl.BlockSpec((1, C, 1), lambda b, t: (b, 0, 0)),
            ],
            out_specs=pl.BlockSpec((1, C, thw), lambda b, t: (b, 0, t)),
        ),
        compiler_params=pltpu.CompilerParams(
            dimension_semantics=("parallel", "parallel"),
            vmem_limit_bytes=vmem_limit),
        input_output_aliases=io_aliases,
    )(x3, s)
    return out.reshape(B, C, H, W)


# --------------------------- pure-JAX reference --------------------------------
def se_reference(x, fc1_w, fc2_w):
    pooled = x.mean(axis=(2, 3))                    # (B, C)
    h = _gelu_tanh(pooled @ fc1_w.T)                # (B, CM)
    s = jax.nn.sigmoid(h @ fc2_w.T)                 # (B, C)
    return x * s[:, :, None, None]


# ----------------------------------- main ---------------------------------------
if __name__ == "__main__":
    B, C, H, W = 2, 32, 16, 16                      # SE(inp=oup=C)
    expansion = 0.25
    CM = int(C * expansion)                         # hidden width = 8

    key = jax.random.PRNGKey(0)
    kx, k1, k2 = jax.random.split(key, 3)
    x = jax.random.normal(kx, (B, C, H, W), jnp.float32)
    # nn.Linear(oup, CM, bias=False).weight -> (CM, oup)
    fc1_w = jax.random.normal(k1, (CM, C), jnp.float32) * (1.0 / math.sqrt(C))
    # nn.Linear(CM, oup, bias=False).weight -> (oup, CM)
    fc2_w = jax.random.normal(k2, (C, CM), jnp.float32) * (1.0 / math.sqrt(CM))

    ref = jax.block_until_ready(se_reference(x, fc1_w, fc2_w))

    # Primary fused single-pass path.
    out = jax.block_until_ready(se_forward(x, fc1_w, fc2_w))
    assert out.shape == (B, C, H, W), out.shape
    err = float(jnp.max(jnp.abs(out - ref)))
    assert jnp.allclose(out, ref, atol=1e-4, rtol=1e-4), err

    # 2-pass fallback path, with a tiny byte target so multiple spatial tiles
    # exercise the (C, 128) accumulator + pl.when finalize logic.
    out2 = jax.block_until_ready(
        se_forward(x, fc1_w, fc2_w, force_two_pass=True,
                   target_block_bytes=16 << 10))
    err2 = float(jnp.max(jnp.abs(out2 - ref)))
    assert jnp.allclose(out2, ref, atol=1e-4, rtol=1e-4), err2

    print("KERNEL_OK")
</pallas_src>

<mosaic_0001>
module attributes {stable_mosaic.version = 11 : i64} {
  func.func @_se_fused_kernel(%arg0: i32, %arg1: memref<2x32x256xf32, #tpu.memory_space<vmem>>, %arg2: memref<8x32xf32, #tpu.memory_space<vmem>>, %arg3: memref<32x8xf32, #tpu.memory_space<vmem>>, %arg4: memref<2x32x256xf32, #tpu.memory_space<vmem>>) attributes {dimension_semantics = [#tpu.dimension_semantics<parallel>], iteration_bounds = array<i64: 1>, scalar_prefetch = 0 : i64, scratch_operands = 0 : i64, tpu.core_type = #tpu.core_type<tc>, window_params = [{transform_indices = @transform_0, window_bounds = array<i64: 2, 32, 256>}, {pipeline_mode = #tpu.pipeline_mode<synchronous>, transform_indices = @transform_1, window_bounds = array<i64: 8, 32>}, {pipeline_mode = #tpu.pipeline_mode<synchronous>, transform_indices = @transform_2, window_bounds = array<i64: 32, 8>}, {transform_indices = @transform_3, window_bounds = array<i64: 2, 32, 256>}]} {
    %c0 = arith.constant 0 : index
    %c0_0 = arith.constant 0 : index
    %c0_1 = arith.constant 0 : index
    %0 = vector.load %arg1[%c0, %c0_0, %c0_1] : memref<2x32x256xf32, #tpu.memory_space<vmem>>, vector<2x32x256xf32>
    %1 = vector.extract_strided_slice %0 {offsets = [0, 0, 0], sizes = [2, 32, 128], strides = [1, 1, 1]} : vector<2x32x256xf32> to vector<2x32x128xf32>
    %2 = vector.extract_strided_slice %0 {offsets = [0, 0, 128], sizes = [2, 32, 128], strides = [1, 1, 1]} : vector<2x32x256xf32> to vector<2x32x128xf32>
    %3 = arith.addf %1, %2 : vector<2x32x128xf32>
    %cst = arith.constant dense<0.000000e+00> : vector<2x32xf32>
    %4 = vector.multi_reduction <add>, %3, %cst [2] : vector<2x32x128xf32> to vector<2x32xf32>
    %cst_2 = arith.constant 3.906250e-03 : f32
    %5 = vector.broadcast %cst_2 : f32 to vector<2x32xf32>
    %6 = arith.mulf %4, %5 : vector<2x32xf32>
    %c0_3 = arith.constant 0 : index
    %c0_4 = arith.constant 0 : index
    %7 = vector.load %arg2[%c0_3, %c0_4] : memref<8x32xf32, #tpu.memory_space<vmem>>, vector<8x32xf32>
    %c0_5 = arith.constant 0 : index
    %c0_6 = arith.constant 0 : index
    %8 = vector.load %arg3[%c0_5, %c0_6] : memref<32x8xf32, #tpu.memory_space<vmem>>, vector<32x8xf32>
    %9 = vector.shape_cast %6 : vector<2x32xf32> to vector<2x1x32xf32>
    %10 = vector.shape_cast %7 : vector<8x32xf32> to vector<1x8x32xf32>
    %11 = vector.broadcast %9 : vector<2x1x32xf32> to vector<2x8x32xf32>
    %12 = vector.broadcast %10 : vector<1x8x32xf32> to vector<2x8x32xf32>
    %13 = arith.mulf %11, %12 : vector<2x8x32xf32>
    %cst_7 = arith.constant dense<0.000000e+00> : vector<2x8xf32>
    %14 = vector.multi_reduction <add>, %13, %cst_7 [2] : vector<2x8x32xf32> to vector<2x8xf32>
    %cst_8 = arith.constant 5.000000e-01 : f32
    %15 = vector.broadcast %cst_8 : f32 to vector<2x8xf32>
    %16 = arith.mulf %15, %14 : vector<2x8xf32>
    %cst_9 = arith.constant 4.471500e-02 : f32
    %17 = vector.broadcast %cst_9 : f32 to vector<2x8xf32>
    %18 = arith.mulf %17, %14 : vector<2x8xf32>
    %19 = arith.mulf %18, %14 : vector<2x8xf32>
    %20 = arith.mulf %19, %14 : vector<2x8xf32>
    %21 = arith.addf %14, %20 : vector<2x8xf32>
    %cst_10 = arith.constant 0.797884583 : f32
    %22 = vector.broadcast %cst_10 : f32 to vector<2x8xf32>
    %23 = arith.mulf %22, %21 : vector<2x8xf32>
    %24 = math.tanh %23 : vector<2x8xf32>
    %cst_11 = arith.constant 1.000000e+00 : f32
    %25 = vector.broadcast %cst_11 : f32 to vector<2x8xf32>
    %26 = arith.addf %25, %24 : vector<2x8xf32>
    %27 = arith.mulf %16, %26 : vector<2x8xf32>
    %28 = vector.shape_cast %27 : vector<2x8xf32> to vector<2x1x8xf32>
    %29 = vector.shape_cast %8 : vector<32x8xf32> to vector<1x32x8xf32>
    %30 = vector.broadcast %28 : vector<2x1x8xf32> to vector<2x32x8xf32>
    %31 = vector.broadcast %29 : vector<1x32x8xf32> to vector<2x32x8xf32>
    %32 = arith.mulf %30, %31 : vector<2x32x8xf32>
    %cst_12 = arith.constant dense<0.000000e+00> : vector<2x32xf32>
    %33 = vector.multi_reduction <add>, %32, %cst_12 [2] : vector<2x32x8xf32> to vector<2x32xf32>
    %34 = arith.negf %33 : vector<2x32xf32>
    %35 = math.exp %34 : vector<2x32xf32>
    %cst_13 = arith.constant 1.000000e+00 : f32
    %36 = vector.broadcast %cst_13 : f32 to vector<2x32xf32>
    %37 = arith.addf %36, %35 : vector<2x32xf32>
    %38 = arith.divf %36, %37 : vector<2x32xf32>
    %39 = vector.shape_cast %38 : vector<2x32xf32> to vector<2x32x1xf32>
    %40 = vector.broadcast %39 : vector<2x32x1xf32> to vector<2x32x256xf32>
    %41 = arith.mulf %0, %40 : vector<2x32x256xf32>
    %c0_14 = arith.constant 0 : index
    %c0_15 = arith.constant 0 : index
    %c0_16 = arith.constant 0 : index
    %42 = vector.load %arg4[%c0_14, %c0_15, %c0_16] : memref<2x32x256xf32, #tpu.memory_space<vmem>>, vector<2x32x256xf32>
    tpu.vector_store %arg4[%c0_14, %c0_15, %c0_16], %41 {strides = array<i32>} : memref<2x32x256xf32, #tpu.memory_space<vmem>>, vector<2x32x256xf32>,
    return
  }
  func.func @transform_0(%arg0: i32) -> (i32, i32, i32) {
    %c0_i32 = arith.constant 0 : i32
    %c0_i32_0 = arith.constant 0 : i32
    %c0_i32_1 = arith.constant 0 : i32
    return %arg0, %c0_i32, %c0_i32_0 : i32, i32, i32
  }
  func.func @transform_1(%arg0: i32) -> (i32, i32) {
    %c0_i32 = arith.constant 0 : i32
    %c0_i32_0 = arith.constant 0 : i32
    %c0_i32_1 = arith.constant 0 : i32
    return %c0_i32, %c0_i32_0 : i32, i32
  }
  func.func @transform_2(%arg0: i32) -> (i32, i32) {
    %c0_i32 = arith.constant 0 : i32
    %c0_i32_0 = arith.constant 0 : i32
    %c0_i32_1 = arith.constant 0 : i32
    return %c0_i32, %c0_i32_0 : i32, i32
  }
  func.func @transform_3(%arg0: i32) -> (i32, i32, i32) {
    %c0_i32 = arith.constant 0 : i32
    %c0_i32_0 = arith.constant 0 : i32
    %c0_i32_1 = arith.constant 0 : i32
    return %arg0, %c0_i32, %c0_i32_0 : i32, i32, i32
  }
}

</mosaic_0001>

<llo_original>
// kernel: tpu_custom_call.1
$region0: #{tpu_custom_call.1}
  #allocation0 [shape = 'u32[]', space=smem, size = 0x4, offset = 0x4, fixed_abs, tag = 'smem constant byte address 0x4 - core index']
  #allocation1 [shape = 'u32[72,128]{1,0:T(1,128)}', space=vmem, size = 0x9000, scoped, tag = 'internal scratch']
  %s0 = inlined_call_operand.hbm [shape: f32[2,32,256], index: 0, kind: input, shape index: {}]
  %s1 = inlined_call_operand.vmem [shape: f32[8,32], index: 1, kind: input, shape index: {}]
  %s2 = inlined_call_operand.vmem [shape: f32[32,8], index: 2, kind: input, shape index: {}]
  %s3 = inlined_call_operand.hbm [shape: f32[2,32,256], index: 3, kind: output, shape index: {}]
  %s4 = sld [smem:[#allocation0]]
  $region26: #{tpu_custom_call.1} parent=0
    _
  %s6 = ssub.s32 1, %s4
  %s7 = scalar_select 0, %s6, %s4
  $region1: #{tpu_custom_call.1} parent=0
    #allocation2 [shape = 'u8[65536]{0}', space=vmem, size = 0x10000, scoped, tag = 'input window, operand 0, single buffered']
    #allocation3 [shape = 's32[1]{0}', space=sflag, size = 0x4, scoped, tag = 'scoped memory for tpu_custom_call.1']
    #allocation4 [shape = 's32[1]{0}', space=sflag, size = 0x4, scoped, tag = 'scoped memory for tpu_custom_call.1']
    #allocation5 [shape = 'u8[65536]{0}', space=vmem, size = 0x10000, scoped, tag = 'output window, operand 0, single buffered']
    %8 = vsyncpa [#allocation3], 0
    %9 = vsyncpa [#allocation4], 0
    // Predicated region
    $region2: #{tpu_custom_call.1} parent=1 // pred_check
      _
    $region3: #{tpu_custom_call.1} parent=1 // pred_check_branch
      %11 = sbr.rel (0) target = $region5
    $region4: #{tpu_custom_call.1} parent=1 // pred_region
      %13 = vsyncadd [#allocation3], 0
      %s14 = sshll.u32 %s0, 4
      %s15 = int_to_ptr.hbm [resolvable:$true] %s14
      %s16 = sshll.u32 [#allocation2], 4
      %s17 = int_to_ptr.vmem [resolvable:$true] %s16
      %22 = dma.hbm_to_vmem [thread:$0]  %s15, 2048, %s17, [#allocation3], 256, 256, 16
    $region5: #{tpu_custom_call.1} parent=1 // pred_fallthru
      _
    // Predicated region
    $region6: #{tpu_custom_call.1} parent=1 // pred_check
      _
    $region7: #{tpu_custom_call.1} parent=1 // pred_check_branch
      %24 = sbr.rel (0) target = $region9
    $region8: #{tpu_custom_call.1} parent=1 // pred_region
      _
    $region9: #{tpu_custom_call.1} parent=1 // pred_fallthru
      _
    // Predicated region
    $region10: #{tpu_custom_call.1} parent=1 // pred_check
      _
    $region11: #{tpu_custom_call.1} parent=1 // pred_check_branch
      %26 = sbr.rel (0) target = $region13
    $region12: #{tpu_custom_call.1} parent=1 // pred_region
      _
    $region13: #{tpu_custom_call.1} parent=1 // pred_fallthru
      _
    // Predicated region
    $region14: #{tpu_custom_call.1} parent=1 // pred_check
      _
    $region15: #{tpu_custom_call.1} parent=1 // pred_check_branch
      %28 = sbr.rel (0) target = $region17
    $region16: #{tpu_custom_call.1} parent=1 // pred_region
      %30 = dma.done [#allocation3], 2048
    $region17: #{tpu_custom_call.1} parent=1 // pred_fallthru
      _
    %v31 = vld [vmem:[#allocation2] sm:$0xff]
    %v32 = vld [vmem:[#allocation2 + $0x8] sm:$0xff]
    %v33 = vld [vmem:[#allocation2 + $0x10] sm:$0xff]
    %v34 = vld [vmem:[#allocation2 + $0x18] sm:$0xff]
    %v35 = vld [vmem:[#allocation2 + $0x20] sm:$0xff]
    %v36 = vld [vmem:[#allocation2 + $0x28] sm:$0xff]
    %v37 = vld [vmem:[#allocation2 + $0x30] sm:$0xff]
    %v38 = vld [vmem:[#allocation2 + $0x38] sm:$0xff]
    %v39 = vld [vmem:[#allocation2 + $0x40] sm:$0xff]
    %v40 = vld [vmem:[#allocation2 + $0x48] sm:$0xff]
    %v41 = vld [vmem:[#allocation2 + $0x50] sm:$0xff]
    %v42 = vld [vmem:[#allocation2 + $0x58] sm:$0xff]
    %v43 = vld [vmem:[#allocation2 + $0x60] sm:$0xff]
    %v44 = vld [vmem:[#allocation2 + $0x68] sm:$0xff]
    %v45 = vld [vmem:[#allocation2 + $0x70] sm:$0xff]
    %v46 = vld [vmem:[#allocation2 + $0x78] sm:$0xff]
    %v47 = vadd.f32 %v31, %v32
    %v48 = vadd.f32 %v33, %v34
    %v49 = vadd.f32 %v35, %v36
    %v50 = vadd.f32 %v37, %v38
    %v51 = vadd.f32 %v39, %v40
    %v52 = vadd.f32 %v41, %v42
    %v53 = vadd.f32 %v43, %v44
    %v54 = vadd.f32 %v45, %v46
    %55 = vadd.xlane.f32.xlu0 %v47
    %v56 = vpop.xlane.xlu0 %55
    %57 = vadd.xlane.f32.xlu0 %v48
    %v58 = vpop.xlane.xlu0 %57
    %59 = vadd.xlane.f32.xlu0 %v49
    %v60 = vpop.xlane.xlu0 %59
    %61 = vadd.xlane.f32.xlu0 %v50
    %v62 = vpop.xlane.xlu0 %61
    %63 = vadd.xlane.f32.xlu0 %v51
    %v64 = vpop.xlane.xlu0 %63
    %65 = vadd.xlane.f32.xlu0 %v52
    %v66 = vpop.xlane.xlu0 %65
    %67 = vadd.xlane.f32.xlu0 %v53
    %v68 = vpop.xlane.xlu0 %67
    %69 = vadd.xlane.f32.xlu0 %v54
    %v70 = vpop.xlane.xlu0 %69
    %v71 = vmul.f32 %v56, 0.00390625
    %v72 = vmul.f32 %v58, 0.00390625
    %v73 = vmul.f32 %v60, 0.00390625
    %v74 = vmul.f32 %v62, 0.00390625
    %v75 = vmul.f32 %v64, 0.00390625
    %v76 = vmul.f32 %v66, 0.00390625
    %v77 = vmul.f32 %v68, 0.00390625
    %v78 = vmul.f32 %v70, 0.00390625
    %v79 = vld [vmem:[%s1] sm:$0xff]
    %v80 = vld [vmem:[%s2] sm:$0xff]
    %v81 = vld [vmem:[%s2 + $0x8] sm:$0xff]
    %v82 = vld [vmem:[%s2 + $0x10] sm:$0xff]
    %v83 = vld [vmem:[%s2 + $0x18] sm:$0xff]
    %v85 = vperm.slane %v79, 0
    %v86 = vlaneseq
    %v87 = vshrl.u32 %v86, 7
    %89 = vset.pattern.permute.xlu0 %v87
    %90 = vperm.xlu0 %89, %v85
    %v91 = vpop.permute.xlu0 %90
    %v92 = vlaneseq
    %v93 = vshrl.u32 %v92, 7
    %v94 = vadd.s32 %v93, 8
    %95 = vset.pattern.permute.xlu0 %v94
    %96 = vperm.xlu0 %95, %v85
    %v97 = vpop.permute.xlu0 %96
    %v98 = vlaneseq
    %v99 = vshrl.u32 %v98, 7
    %v100 = vadd.s32 %v99, 16
    %101 = vset.pattern.permute.xlu0 %v100
    %102 = vperm.xlu0 %101, %v85
    %v103 = vpop.permute.xlu0 %102
    %v104 = vlaneseq
    %v105 = vshrl.u32 %v104, 7
    %v106 = vadd.s32 %v105, 24
    %107 = vset.pattern.permute.xlu0 %v106
    %108 = vperm.xlu0 %107, %v85
    %v109 = vpop.permute.xlu0 %108
    %v110 = vperm.slane %v79, 1
    %v111 = vlaneseq
    %v112 = vshrl.u32 %v111, 7
    %114 = vset.pattern.permute.xlu0 %v112
    %115 = vperm.xlu0 %114, %v110
    %v116 = vpop.permute.xlu0 %115
    %v117 = vlaneseq
    %v118 = vshrl.u32 %v117, 7
    %v119 = vadd.s32 %v118, 8
    %120 = vset.pattern.permute.xlu0 %v119
    %121 = vperm.xlu0 %120, %v110
    %v122 = vpop.permute.xlu0 %121
    %v123 = vlaneseq
    %v124 = vshrl.u32 %v123, 7
    %v125 = vadd.s32 %v124, 16
    %126 = vset.pattern.permute.xlu0 %v125
    %127 = vperm.xlu0 %126, %v110
    %v128 = vpop.permute.xlu0 %127
    %v129 = vlaneseq
    %v130 = vshrl.u32 %v129, 7
    %v131 = vadd.s32 %v130, 24
    %132 = vset.pattern.permute.xlu0 %v131
    %133 = vperm.xlu0 %132, %v110
    %v134 = vpop.permute.xlu0 %133
    %v135 = vperm.slane %v79, 2
    %v136 = vlaneseq
    %v137 = vshrl.u32 %v136, 7
    %139 = vset.pattern.permute.xlu0 %v137
    %140 = vperm.xlu0 %139, %v135
    %v141 = vpop.permute.xlu0 %140
    %v142 = vlaneseq
    %v143 = vshrl.u32 %v142, 7
    %v144 = vadd.s32 %v143, 8
    %145 = vset.pattern.permute.xlu0 %v144
    %146 = vperm.xlu0 %145, %v135
    %v147 = vpop.permute.xlu0 %146
    %v148 = vlaneseq
    %v149 = vshrl.u32 %v148, 7
    %v150 = vadd.s32 %v149, 16
    %151 = vset.pattern.permute.xlu0 %v150
    %152 = vperm.xlu0 %151, %v135
    %v153 = vpop.permute.xlu0 %152
    %v154 = vlaneseq
    %v155 = vshrl.u32 %v154, 7
    %v156 = vadd.s32 %v155, 24
    %157 = vset.pattern.permute.xlu0 %v156
    %158 = vperm.xlu0 %157, %v135
    %v159 = vpop.permute.xlu0 %158
    %v160 = vperm.slane %v79, 3
    %v161 = vlaneseq
    %v162 = vshrl.u32 %v161, 7
    %164 = vset.pattern.permute.xlu0 %v162
    %165 = vperm.xlu0 %164, %v160
    %v166 = vpop.permute.xlu0 %165
    %v167 = vlaneseq
    %v168 = vshrl.u32 %v167, 7
    %v169 = vadd.s32 %v168, 8
    %170 = vset.pattern.permute.xlu0 %v169
    %171 = vperm.xlu0 %170, %v160
    %v172 = vpop.permute.xlu0 %171
    %v173 = vlaneseq
    %v174 = vshrl.u32 %v173, 7
    %v175 = vadd.s32 %v174, 16
    %176 = vset.pattern.permute.xlu0 %v175
    %177 = vperm.xlu0 %176, %v160
    %v178 = vpop.permute.xlu0 %177
    %v179 = vlaneseq
    %v180 = vshrl.u32 %v179, 7
    %v181 = vadd.s32 %v180, 24
    %182 = vset.pattern.permute.xlu0 %v181
    %183 = vperm.xlu0 %182, %v160
    %v184 = vpop.permute.xlu0 %183
    %v185 = vperm.slane %v79, 4
    %v186 = vlaneseq
    %v187 = vshrl.u32 %v186, 7
    %189 = vset.pattern.permute.xlu0 %v187
    %190 = vperm.xlu0 %189, %v185
    %v191 = vpop.permute.xlu0 %190
    %v192 = vlaneseq
    %v193 = vshrl.u32 %v192, 7
    %v194 = vadd.s32 %v193, 8
    %195 = vset.pattern.permute.xlu0 %v194
    %196 = vperm.xlu0 %195, %v185
    %v197 = vpop.permute.xlu0 %196
    %v198 = vlaneseq
    %v199 = vshrl.u32 %v198, 7
    %v200 = vadd.s32 %v199, 16
    %201 = vset.pattern.permute.xlu0 %v200
    %202 = vperm.xlu0 %201, %v185
    %v203 = vpop.permute.xlu0 %202
    %v204 = vlaneseq
    %v205 = vshrl.u32 %v204, 7
    %v206 = vadd.s32 %v205, 24
    %207 = vset.pattern.permute.xlu0 %v206
    %208 = vperm.xlu0 %207, %v185
    %v209 = vpop.permute.xlu0 %208
    %v210 = vperm.slane %v79, 5
    %v211 = vlaneseq
    %v212 = vshrl.u32 %v211, 7
    %214 = vset.pattern.permute.xlu0 %v212
    %215 = vperm.xlu0 %214, %v210
    %v216 = vpop.permute.xlu0 %215
    %v217 = vlaneseq
    %v218 = vshrl.u32 %v217, 7
    %v219 = vadd.s32 %v218, 8
    %220 = vset.pattern.permute.xlu0 %v219
    %221 = vperm.xlu0 %220, %v210
    %v222 = vpop.permute.xlu0 %221
    %v223 = vlaneseq
    %v224 = vshrl.u32 %v223, 7
    %v225 = vadd.s32 %v224, 16
    %226 = vset.pattern.permute.xlu0 %v225
    %227 = vperm.xlu0 %226, %v210
    %v228 = vpop.permute.xlu0 %227
    %v229 = vlaneseq
    %v230 = vshrl.u32 %v229, 7
    %v231 = vadd.s32 %v230, 24
    %232 = vset.pattern.permute.xlu0 %v231
    %233 = vperm.xlu0 %232, %v210
    %v234 = vpop.permute.xlu0 %233
    %v235 = vperm.slane %v79, 6
    %v236 = vlaneseq
    %v237 = vshrl.u32 %v236, 7
    %239 = vset.pattern.permute.xlu0 %v237
    %240 = vperm.xlu0 %239, %v235
    %v241 = vpop.permute.xlu0 %240
    %v242 = vlaneseq
    %v243 = vshrl.u32 %v242, 7
    %v244 = vadd.s32 %v243, 8
    %245 = vset.pattern.permute.xlu0 %v244
    %246 = vperm.xlu0 %245, %v235
    %v247 = vpop.permute.xlu0 %246
    %v248 = vlaneseq
    %v249 = vshrl.u32 %v248, 7
    %v250 = vadd.s32 %v249, 16
    %251 = vset.pattern.permute.xlu0 %v250
    %252 = vperm.xlu0 %251, %v235
    %v253 = vpop.permute.xlu0 %252
    %v254 = vlaneseq
    %v255 = vshrl.u32 %v254, 7
    %v256 = vadd.s32 %v255, 24
    %257 = vset.pattern.permute.xlu0 %v256
    %258 = vperm.xlu0 %257, %v235
    %v259 = vpop.permute.xlu0 %258
    %v260 = vperm.slane %v79, 7
    %v261 = vlaneseq
    %v262 = vshrl.u32 %v261, 7
    %264 = vset.pattern.permute.xlu0 %v262
    %265 = vperm.xlu0 %264, %v260
    %v266 = vpop.permute.xlu0 %265
    %v267 = vlaneseq
    %v268 = vshrl.u32 %v267, 7
    %v269 = vadd.s32 %v268, 8
    %270 = vset.pattern.permute.xlu0 %v269
    %271 = vperm.xlu0 %270, %v260
    %v272 = vpop.permute.xlu0 %271
    %v273 = vlaneseq
    %v274 = vshrl.u32 %v273, 7
    %v275 = vadd.s32 %v274, 16
    %276 = vset.pattern.permute.xlu0 %v275
    %277 = vperm.xlu0 %276, %v260
    %v278 = vpop.permute.xlu0 %277
    %v279 = vlaneseq
    %v280 = vshrl.u32 %v279, 7
    %v281 = vadd.s32 %v280, 24
    %282 = vset.pattern.permute.xlu0 %v281
    %283 = vperm.xlu0 %282, %v260
    %v284 = vpop.permute.xlu0 %283
    %v317 = vmul.f32 %v71, %v91
    %v318 = vmul.f32 %v72, %v97
    %v319 = vmul.f32 %v73, %v103
    %v320 = vmul.f32 %v74, %v109
    %v321 = vmul.f32 %v71, %v116
    %v322 = vmul.f32 %v72, %v122
    %v323 = vmul.f32 %v73, %v128
    %v324 = vmul.f32 %v74, %v134
    %v325 = vmul.f32 %v71, %v141
    %v326 = vmul.f32 %v72, %v147
    %v327 = vmul.f32 %v73, %v153
    %v328 = vmul.f32 %v74, %v159
    %v329 = vmul.f32 %v71, %v166
    %v330 = vmul.f32 %v72, %v172
    %v331 = vmul.f32 %v73, %v178
    %v332 = vmul.f32 %v74, %v184
    %v333 = vmul.f32 %v71, %v191
    %v334 = vmul.f32 %v72, %v197
    %v335 = vmul.f32 %v73, %v203
    %v336 = vmul.f32 %v74, %v209
    %v337 = vmul.f32 %v71, %v216
    %v338 = vmul.f32 %v72, %v222
    %v339 = vmul.f32 %v73, %v228
    %v340 = vmul.f32 %v74, %v234
    %v341 = vmul.f32 %v71, %v241
    %v342 = vmul.f32 %v72, %v247
    %v343 = vmul.f32 %v73, %v253
    %v344 = vmul.f32 %v74, %v259
    %v345 = vmul.f32 %v71, %v266
    %v346 = vmul.f32 %v72, %v272
    %v347 = vmul.f32 %v73, %v278
    %v348 = vmul.f32 %v74, %v284
    %v349 = vmul.f32 %v75, %v91
    %v350 = vmul.f32 %v76, %v97
    %v351 = vmul.f32 %v77, %v103
    %v352 = vmul.f32 %v78, %v109
    %v353 = vmul.f32 %v75, %v116
    %v354 = vmul.f32 %v76, %v122
    %v355 = vmul.f32 %v77, %v128
    %v356 = vmul.f32 %v78, %v134
    %v357 = vmul.f32 %v75, %v141
    %v358 = vmul.f32 %v76, %v147
    %v359 = vmul.f32 %v77, %v153
    %v360 = vmul.f32 %v78, %v159
    %v361 = vmul.f32 %v75, %v166
    %v362 = vmul.f32 %v76, %v172
    %v363 = vmul.f32 %v77, %v178
    %v364 = vmul.f32 %v78, %v184
    %v365 = vmul.f32 %v75, %v191
    %v366 = vmul.f32 %v76, %v197
    %v367 = vmul.f32 %v77, %v203
    %v368 = vmul.f32 %v78, %v209
    %v369 = vmul.f32 %v75, %v216
    %v370 = vmul.f32 %v76, %v222
    %v371 = vmul.f32 %v77, %v228
    %v372 = vmul.f32 %v78, %v234
    %v373 = vmul.f32 %v75, %v241
    %v374 = vmul.f32 %v76, %v247
    %v375 = vmul.f32 %v77, %v253
    %v376 = vmul.f32 %v78, %v259
    %v377 = vmul.f32 %v75, %v266
    %v378 = vmul.f32 %v76, %v272
    %v379 = vmul.f32 %v77, %v278
    %v380 = vmul.f32 %v78, %v284
    %445 = vset.pattern.permute.xlu0 0
    %446 = vperm.xlu0 %445, %v317
    %v447 = vpop.permute.xlu0 %446
    %448 = vset.pattern.permute.xlu0 0
    %449 = vperm.xlu0 %448, %v318
    %v450 = vpop.permute.xlu0 %449
    %451 = vset.pattern.permute.xlu0 0
    %452 = vperm.xlu0 %451, %v319
    %v453 = vpop.permute.xlu0 %452
    %454 = vset.pattern.permute.xlu0 0
    %455 = vperm.xlu0 %454, %v320
    %v456 = vpop.permute.xlu0 %455
    %457 = vset.pattern.permute.xlu0 0
    %458 = vperm.xlu0 %457, %v321
    %v459 = vpop.permute.xlu0 %458
    %460 = vset.pattern.permute.xlu0 0
    %461 = vperm.xlu0 %460, %v322
    %v462 = vpop.permute.xlu0 %461
    %463 = vset.pattern.permute.xlu0 0
    %464 = vperm.xlu0 %463, %v323
    %v465 = vpop.permute.xlu0 %464
    %466 = vset.pattern.permute.xlu0 0
    %467 = vperm.xlu0 %466, %v324
    %v468 = vpop.permute.xlu0 %467
    %469 = vset.pattern.permute.xlu0 0
    %470 = vperm.xlu0 %469, %v325
    %v471 = vpop.permute.xlu0 %470
    %472 = vset.pattern.permute.xlu0 0
    %473 = vperm.xlu0 %472, %v326
    %v474 = vpop.permute.xlu0 %473
    %475 = vset.pattern.permute.xlu0 0
    %476 = vperm.xlu0 %475, %v327
    %v477 = vpop.permute.xlu0 %476
    %478 = vset.pattern.permute.xlu0 0
    %479 = vperm.xlu0 %478, %v328
    %v480 = vpop.permute.xlu0 %479
    %481 = vset.pattern.permute.xlu0 0
    %482 = vperm.xlu0 %481, %v329
    %v483 = vpop.permute.xlu0 %482
    %484 = vset.pattern.permute.xlu0 0
    %485 = vperm.xlu0 %484, %v330
    %v486 = vpop.permute.xlu0 %485
    %487 = vset.pattern.permute.xlu0 0
    %488 = vperm.xlu0 %487, %v331
    %v489 = vpop.permute.xlu0 %488
    %490 = vset.pattern.permute.xlu0 0
    %491 = vperm.xlu0 %490, %v332
    %v492 = vpop.permute.xlu0 %491
    %493 = vset.pattern.permute.xlu0 0
    %494 = vperm.xlu0 %493, %v333
    %v495 = vpop.permute.xlu0 %494
    %496 = vset.pattern.permute.xlu0 0
    %497 = vperm.xlu0 %496, %v334
    %v498 = vpop.permute.xlu0 %497
    %499 = vset.pattern.permute.xlu0 0
    %500 = vperm.xlu0 %499, %v335
    %v501 = vpop.permute.xlu0 %500
    %502 = vset.pattern.permute.xlu0 0
    %503 = vperm.xlu0 %502, %v336
    %v504 = vpop.permute.xlu0 %503
    %505 = vset.pattern.permute.xlu0 0
    %506 = vperm.xlu0 %505, %v337
    %v507 = vpop.permute.xlu0 %506
    %508 = vset.pattern.permute.xlu0 0
    %509 = vperm.xlu0 %508, %v338
    %v510 = vpop.permute.xlu0 %509
    %511 = vset.pattern.permute.xlu0 0
    %512 = vperm.xlu0 %511, %v339
    %v513 = vpop.permute.xlu0 %512
    %514 = vset.pattern.permute.xlu0 0
    %515 = vperm.xlu0 %514, %v340
    %v516 = vpop.permute.xlu0 %515
    %517 = vset.pattern.permute.xlu0 0
    %518 = vperm.xlu0 %517, %v341
    %v519 = vpop.permute.xlu0 %518
    %520 = vset.pattern.permute.xlu0 0
    %521 = vperm.xlu0 %520, %v342
    %v522 = vpop.permute.xlu0 %521
    %523 = vset.pattern.permute.xlu0 0
    %524 = vperm.xlu0 %523, %v343
    %v525 = vpop.permute.xlu0 %524
    %526 = vset.pattern.permute.xlu0 0
    %527 = vperm.xlu0 %526, %v344
    %v528 = vpop.permute.xlu0 %527
    %529 = vset.pattern.permute.xlu0 0
    %530 = vperm.xlu0 %529, %v345
    %v531 = vpop.permute.xlu0 %530
    %532 = vset.pattern.permute.xlu0 0
    %533 = vperm.xlu0 %532, %v346
    %v534 = vpop.permute.xlu0 %533
    %535 = vset.pattern.permute.xlu0 0
    %536 = vperm.xlu0 %535, %v347
    %v537 = vpop.permute.xlu0 %536
    %538 = vset.pattern.permute.xlu0 0
    %539 = vperm.xlu0 %538, %v348
    %v540 = vpop.permute.xlu0 %539
    %541 = vset.pattern.permute.xlu0 0
    %542 = vperm.xlu0 %541, %v349
    %v543 = vpop.permute.xlu0 %542
    %544 = vset.pattern.permute.xlu0 0
    %545 = vperm.xlu0 %544, %v350
    %v546 = vpop.permute.xlu0 %545
    %547 = vset.pattern.permute.xlu0 0
    %548 = vperm.xlu0 %547, %v351
    %v549 = vpop.permute.xlu0 %548
    %550 = vset.pattern.permute.xlu0 0
    %551 = vperm.xlu0 %550, %v352
    %v552 = vpop.permute.xlu0 %551
    %553 = vset.pattern.permute.xlu0 0
    %554 = vperm.xlu0 %553, %v353
    %v555 = vpop.permute.xlu0 %554
    %556 = vset.pattern.permute.xlu0 0
    %557 = vperm.xlu0 %556, %v354
    %v558 = vpop.permute.xlu0 %557
    %559 = vset.pattern.permute.xlu0 0
    %560 = vperm.xlu0 %559, %v355
    %v561 = vpop.permute.xlu0 %560
    %562 = vset.pattern.permute.xlu0 0
    %563 = vperm.xlu0 %562, %v356
    %v564 = vpop.permute.xlu0 %563
    %565 = vset.pattern.permute.xlu0 0
    %566 = vperm.xlu0 %565, %v357
    %v567 = vpop.permute.xlu0 %566
    %568 = vset.pattern.permute.xlu0 0
    %569 = vperm.xlu0 %568, %v358
    %v570 = vpop.permute.xlu0 %569
    %571 = vset.pattern.permute.xlu0 0
    %572 = vperm.xlu0 %571, %v359
    %v573 = vpop.permute.xlu0 %572
    %574 = vset.pattern.permute.xlu0 0
    %575 = vperm.xlu0 %574, %v360
    %v576 = vpop.permute.xlu0 %575
    %577 = vset.pattern.permute.xlu0 0
    %578 = vperm.xlu0 %577, %v361
    %v579 = vpop.permute.xlu0 %578
    %580 = vset.pattern.permute.xlu0 0
    %581 = vperm.xlu0 %580, %v362
    %v582 = vpop.permute.xlu0 %581
    %583 = vset.pattern.permute.xlu0 0
    %584 = vperm.xlu0 %583, %v363
    %v585 = vpop.permute.xlu0 %584
    %586 = vset.pattern.permute.xlu0 0
    %587 = vperm.xlu0 %586, %v364
    %v588 = vpop.permute.xlu0 %587
    %589 = vset.pattern.permute.xlu0 0
    %590 = vperm.xlu0 %589, %v365
    %v591 = vpop.permute.xlu0 %590
    %592 = vset.pattern.permute.xlu0 0
    %593 = vperm.xlu0 %592, %v366
    %v594 = vpop.permute.xlu0 %593
    %595 = vset.pattern.permute.xlu0 0
    %596 = vperm.xlu0 %595, %v367
    %v597 = vpop.permute.xlu0 %596
    %598 = vset.pattern.permute.xlu0 0
    %599 = vperm.xlu0 %598, %v368
    %v600 = vpop.permute.xlu0 %599
    %601 = vset.pattern.permute.xlu0 0
    %602 = vperm.xlu0 %601, %v369
    %v603 = vpop.permute.xlu0 %602
    %604 = vset.pattern.permute.xlu0 0
    %605 = vperm.xlu0 %604, %v370
    %v606 = vpop.permute.xlu0 %605
    %607 = vset.pattern.permute.xlu0 0
    %608 = vperm.xlu0 %607, %v371
    %v609 = vpop.permute.xlu0 %608
    %610 = vset.pattern.permute.xlu0 0
    %611 = vperm.xlu0 %610, %v372
    %v612 = vpop.permute.xlu0 %611
    %613 = vset.pattern.permute.xlu0 0
    %614 = vperm.xlu0 %613, %v373
    %v615 = vpop.permute.xlu0 %614
    %616 = vset.pattern.permute.xlu0 0
    %617 = vperm.xlu0 %616, %v374
    %v618 = vpop.permute.xlu0 %617
    %619 = vset.pattern.permute.xlu0 0
    %620 = vperm.xlu0 %619, %v375
    %v621 = vpop.permute.xlu0 %620
    %622 = vset.pattern.permute.xlu0 0
    %623 = vperm.xlu0 %622, %v376
    %v624 = vpop.permute.xlu0 %623
    %625 = vset.pattern.permute.xlu0 0
    %626 = vperm.xlu0 %625, %v377
    %v627 = vpop.permute.xlu0 %626
    %628 = vset.pattern.permute.xlu0 0
    %629 = vperm.xlu0 %628, %v378
    %v630 = vpop.permute.xlu0 %629
    %631 = vset.pattern.permute.xlu0 0
    %632 = vperm.xlu0 %631, %v379
    %v633 = vpop.permute.xlu0 %632
    %634 = vset.pattern.permute.xlu0 0
    %635 = vperm.xlu0 %634, %v380
    %v636 = vpop.permute.xlu0 %635
    %v637 = vlaneseq
    %v638 = vand.u32 %v637, 127
    %v639 = vperm.slane %v447, %v638
    %v640 = vadd.s32 %v638, 4294967288
    %v641 = vperm.slane %v450, %v640
    %vm642 = vcmask 130112
    %v643 = vsel %vm642, %v641, %v639
    %v644 = vadd.s32 %v638, 4294967280
    %v645 = vperm.slane %v453, %v644
    %vm646 = vcmask 195712
    %v647 = vsel %vm646, %v645, %v643
    %v648 = vadd.s32 %v638, 4294967272
    %v649 = vperm.slane %v456, %v648
    %vm650 = vcmask 261312
    %v651 = vsel %vm650, %v649, %v647
    %v652 = vperm.slane %v459, %v638
    %v653 = vperm.slane %v462, %v640
    %v654 = vsel %vm642, %v653, %v652
    %v655 = vperm.slane %v465, %v644
    %v656 = vsel %vm646, %v655, %v654
    %v657 = vperm.slane %v468, %v648
    %v658 = vsel %vm650, %v657, %v656
    %v659 = vperm.slane %v471, %v638
    %v660 = vperm.slane %v474, %v640
    %v661 = vsel %vm642, %v660, %v659
    %v662 = vperm.slane %v477, %v644
    %v663 = vsel %vm646, %v662, %v661
    %v664 = vperm.slane %v480, %v648
    %v665 = vsel %vm650, %v664, %v663
    %v666 = vperm.slane %v483, %v638
    %v667 = vperm.slane %v486, %v640
    %v668 = vsel %vm642, %v667, %v666
    %v669 = vperm.slane %v489, %v644
    %v670 = vsel %vm646, %v669, %v668
    %v671 = vperm.slane %v492, %v648
    %v672 = vsel %vm650, %v671, %v670
    %v673 = vperm.slane %v495, %v638
    %v674 = vperm.slane %v498, %v640
    %v675 = vsel %vm642, %v674, %v673
    %v676 = vperm.slane %v501, %v644
    %v677 = vsel %vm646, %v676, %v675
    %v678 = vperm.slane %v504, %v648
    %v679 = vsel %vm650, %v678, %v677
    %v680 = vperm.slane %v507, %v638
    %v681 = vperm.slane %v510, %v640
    %v682 = vsel %vm642, %v681, %v680
    %v683 = vperm.slane %v513, %v644
    %v684 = vsel %vm646, %v683, %v682
    %v685 = vperm.slane %v516, %v648
    %v686 = vsel %vm650, %v685, %v684
    %v687 = vperm.slane %v519, %v638
    %v688 = vperm.slane %v522, %v640
    %v689 = vsel %vm642, %v688, %v687
    %v690 = vperm.slane %v525, %v644
    %v691 = vsel %vm646, %v690, %v689
    %v692 = vperm.slane %v528, %v648
    %v693 = vsel %vm650, %v692, %v691
    %v694 = vperm.slane %v531, %v638
    %v695 = vperm.slane %v534, %v640
    %v696 = vsel %vm642, %v695, %v694
    %v697 = vperm.slane %v537, %v644
    %v698 = vsel %vm646, %v697, %v696
    %v699 = vperm.slane %v540, %v648
    %v700 = vsel %vm650, %v699, %v698
    %v701 = vperm.slane %v543, %v638
    %v702 = vperm.slane %v546, %v640
    %v703 = vsel %vm642, %v702, %v701
    %v704 = vperm.slane %v549, %v644
    %v705 = vsel %vm646, %v704, %v703
    %v706 = vperm.slane %v552, %v648
    %v707 = vsel %vm650, %v706, %v705
    %v708 = vperm.slane %v555, %v638
    %v709 = vperm.slane %v558, %v640
    %v710 = vsel %vm642, %v709, %v708
    %v711 = vperm.slane %v561, %v644
    %v712 = vsel %vm646, %v711, %v710
    %v713 = vperm.slane %v564, %v648
    %v714 = vsel %vm650, %v713, %v712
    %v715 = vperm.slane %v567, %v638
    %v716 = vperm.slane %v570, %v640
    %v717 = vsel %vm642, %v716, %v715
    %v718 = vperm.slane %v573, %v644
    %v719 = vsel %vm646, %v718, %v717
    %v720 = vperm.slane %v576, %v648
    %v721 = vsel %vm650, %v720, %v719
    %v722 = vperm.slane %v579, %v638
    %v723 = vperm.slane %v582, %v640
    %v724 = vsel %vm642, %v723, %v722
    %v725 = vperm.slane %v585, %v644
    %v726 = vsel %vm646, %v725, %v724
    %v727 = vperm.slane %v588, %v648
    %v728 = vsel %vm650, %v727, %v726
    %v729 = vperm.slane %v591, %v638
    %v730 = vperm.slane %v594, %v640
    %v731 = vsel %vm642, %v730, %v729
    %v732 = vperm.slane %v597, %v644
    %v733 = vsel %vm646, %v732, %v731
    %v734 = vperm.slane %v600, %v648
    %v735 = vsel %vm650, %v734, %v733
    %v736 = vperm.slane %v603, %v638
    %v737 = vperm.slane %v606, %v640
    %v738 = vsel %vm642, %v737, %v736
    %v739 = vperm.slane %v609, %v644
    %v740 = vsel %vm646, %v739, %v738
    %v741 = vperm.slane %v612, %v648
    %v742 = vsel %vm650, %v741, %v740
    %v743 = vperm.slane %v615, %v638
    %v744 = vperm.slane %v618, %v640
    %v745 = vsel %vm642, %v744, %v743
    %v746 = vperm.slane %v621, %v644
    %v747 = vsel %vm646, %v746, %v745
    %v748 = vperm.slane %v624, %v648
    %v749 = vsel %vm650, %v748, %v747
    %v750 = vperm.slane %v627, %v638
    %v751 = vperm.slane %v630, %v640
    %v752 = vsel %vm642, %v751, %v750
    %v753 = vperm.slane %v633, %v644
    %v754 = vsel %vm646, %v753, %v752
    %v755 = vperm.slane %v636, %v648
    %v756 = vsel %vm650, %v755, %v754
    %vm757 = vcmask 1041409
    %v758 = vsel %vm757, %v658, %v651
    %vm759 = vcmask 1042434
    %v760 = vsel %vm759, %v665, %v758
    %vm761 = vcmask 1043459
    %v762 = vsel %vm761, %v672, %v760
    %vm763 = vcmask 1044484
    %v764 = vsel %vm763, %v679, %v762
    %vm765 = vcmask 1045509
    %v766 = vsel %vm765, %v686, %v764
    %vm767 = vcmask 1046534
    %v768 = vsel %vm767, %v693, %v766
    %vm769 = vcmask 1047559
    %v770 = vsel %vm769, %v700, %v768
    %v771 = vsel %vm757, %v714, %v707
    %v772 = vsel %vm759, %v721, %v771
    %v773 = vsel %vm761, %v728, %v772
    %v774 = vsel %vm763, %v735, %v773
    %v775 = vsel %vm765, %v742, %v774
    %v776 = vsel %vm767, %v749, %v775
    %v777 = vsel %vm769, %v756, %v776
    %vm780 = vcmask 261120
    %v781 = vsel %vm780, %v770, 0.0
    %782 = vadd.xlane.f32.xlu0 %v781
    %v783 = vpop.xlane.xlu0 %782
    %v784 = vsel %vm780, %v777, 0.0
    %785 = vadd.xlane.f32.xlu0 %v784
    %v786 = vpop.xlane.xlu0 %785
    %v787 = vmul.f32 %v783, 0.5
    %v788 = vmul.f32 %v786, 0.5
    %v789 = vmul.f32 %v783, 0.044715
    %v790 = vmul.f32 %v786, 0.044715
    %v791 = vmul.f32 %v789, %v783
    %v792 = vmul.f32 %v790, %v786
    %v793 = vmul.f32 %v791, %v783
    %v794 = vmul.f32 %v792, %v786
    %v795 = vadd.f32 %v783, %v793
    %v796 = vadd.f32 %v786, %v794
    %v797 = vmul.f32 %v795, 0.7978846
    %v798 = vmul.f32 %v796, 0.7978846
    %v799 = vtanh.pop %v797
    %v800 = vtanh.pop %v798
    %v801 = vadd.f32 %v799, 1.0
    %v802 = vadd.f32 %v800, 1.0
    %v803 = vmul.f32 %v787, %v801
    %v804 = vmul.f32 %v788, %v802
    %v809 = vperm.slane %v80, 0
    %v810 = vlaneseq
    %v811 = vshrl.u32 %v810, 7
    %813 = vset.pattern.permute.xlu0 %v811
    %814 = vperm.xlu0 %813, %v809
    %v815 = vpop.permute.xlu0 %814
    %v816 = vperm.slane %v80, 1
    %v817 = vlaneseq
    %v818 = vshrl.u32 %v817, 7
    %820 = vset.pattern.permute.xlu0 %v818
    %821 = vperm.xlu0 %820, %v816
    %v822 = vpop.permute.xlu0 %821
    %v823 = vperm.slane %v80, 2
    %v824 = vlaneseq
    %v825 = vshrl.u32 %v824, 7
    %827 = vset.pattern.permute.xlu0 %v825
    %828 = vperm.xlu0 %827, %v823
    %v829 = vpop.permute.xlu0 %828
    %v830 = vperm.slane %v80, 3
    %v831 = vlaneseq
    %v832 = vshrl.u32 %v831, 7
    %834 = vset.pattern.permute.xlu0 %v832
    %835 = vperm.xlu0 %834, %v830
    %v836 = vpop.permute.xlu0 %835
    %v837 = vperm.slane %v80, 4
    %v838 = vlaneseq
    %v839 = vshrl.u32 %v838, 7
    %841 = vset.pattern.permute.xlu0 %v839
    %842 = vperm.xlu0 %841, %v837
    %v843 = vpop.permute.xlu0 %842
    %v844 = vperm.slane %v80, 5
    %v845 = vlaneseq
    %v846 = vshrl.u32 %v845, 7
    %848 = vset.pattern.permute.xlu0 %v846
    %849 = vperm.xlu0 %848, %v844
    %v850 = vpop.permute.xlu0 %849
    %v851 = vperm.slane %v80, 6
    %v852 = vlaneseq
    %v853 = vshrl.u32 %v852, 7
    %855 = vset.pattern.permute.xlu0 %v853
    %856 = vperm.xlu0 %855, %v851
    %v857 = vpop.permute.xlu0 %856
    %v858 = vperm.slane %v80, 7
    %v859 = vlaneseq
    %v860 = vshrl.u32 %v859, 7
    %862 = vset.pattern.permute.xlu0 %v860
    %863 = vperm.xlu0 %862, %v858
    %v864 = vpop.permute.xlu0 %863
    %v865 = vperm.slane %v81, 0
    %v866 = vlaneseq
    %v867 = vshrl.u32 %v866, 7
    %869 = vset.pattern.permute.xlu0 %v867
    %870 = vperm.xlu0 %869, %v865
    %v871 = vpop.permute.xlu0 %870
    %v872 = vperm.slane %v81, 1
    %v873 = vlaneseq
    %v874 = vshrl.u32 %v873, 7
    %876 = vset.pattern.permute.xlu0 %v874
    %877 = vperm.xlu0 %876, %v872
    %v878 = vpop.permute.xlu0 %877
    %v879 = vperm.slane %v81, 2
    %v880 = vlaneseq
    %v881 = vshrl.u32 %v880, 7
    %883 = vset.pattern.permute.xlu0 %v881
    %884 = vperm.xlu0 %883, %v879
    %v885 = vpop.permute.xlu0 %884
    %v886 = vperm.slane %v81, 3
    %v887 = vlaneseq
    %v888 = vshrl.u32 %v887, 7
    %890 = vset.pattern.permute.xlu0 %v888
    %891 = vperm.xlu0 %890, %v886
    %v892 = vpop.permute.xlu0 %891
    %v893 = vperm.slane %v81, 4
    %v894 = vlaneseq
    %v895 = vshrl.u32 %v894, 7
    %897 = vset.pattern.permute.xlu0 %v895
    %898 = vperm.xlu0 %897, %v893
    %v899 = vpop.permute.xlu0 %898
    %v900 = vperm.slane %v81, 5
    %v901 = vlaneseq
    %v902 = vshrl.u32 %v901, 7
    %904 = vset.pattern.permute.xlu0 %v902
    %905 = vperm.xlu0 %904, %v900
    %v906 = vpop.permute.xlu0 %905
    %v907 = vperm.slane %v81, 6
    %v908 = vlaneseq
    %v909 = vshrl.u32 %v908, 7
    %911 = vset.pattern.permute.xlu0 %v909
    %912 = vperm.xlu0 %911, %v907
    %v913 = vpop.permute.xlu0 %912
    %v914 = vperm.slane %v81, 7
    %v915 = vlaneseq
    %v916 = vshrl.u32 %v915, 7
    %918 = vset.pattern.permute.xlu0 %v916
    %919 = vperm.xlu0 %918, %v914
    %v920 = vpop.permute.xlu0 %919
    %v921 = vperm.slane %v82, 0
    %v922 = vlaneseq
    %v923 = vshrl.u32 %v922, 7
    %925 = vset.pattern.permute.xlu0 %v923
    %926 = vperm.xlu0 %925, %v921
    %v927 = vpop.permute.xlu0 %926
    %v928 = vperm.slane %v82, 1
    %v929 = vlaneseq
    %v930 = vshrl.u32 %v929, 7
    %932 = vset.pattern.permute.xlu0 %v930
    %933 = vperm.xlu0 %932, %v928
    %v934 = vpop.permute.xlu0 %933
    %v935 = vperm.slane %v82, 2
    %v936 = vlaneseq
    %v937 = vshrl.u32 %v936, 7
    %939 = vset.pattern.permute.xlu0 %v937
    %940 = vperm.xlu0 %939, %v935
    %v941 = vpop.permute.xlu0 %940
    %v942 = vperm.slane %v82, 3
    %v943 = vlaneseq
    %v944 = vshrl.u32 %v943, 7
    %946 = vset.pattern.permute.xlu0 %v944
    %947 = vperm.xlu0 %946, %v942
    %v948 = vpop.permute.xlu0 %947
    %v949 = vperm.slane %v82, 4
    %v950 = vlaneseq
    %v951 = vshrl.u32 %v950, 7
    %953 = vset.pattern.permute.xlu0 %v951
    %954 = vperm.xlu0 %953, %v949
    %v955 = vpop.permute.xlu0 %954
    %v956 = vperm.slane %v82, 5
    %v957 = vlaneseq
    %v958 = vshrl.u32 %v957, 7
    %960 = vset.pattern.permute.xlu0 %v958
    %961 = vperm.xlu0 %960, %v956
    %v962 = vpop.permute.xlu0 %961
    %v963 = vperm.slane %v82, 6
    %v964 = vlaneseq
    %v965 = vshrl.u32 %v964, 7
    %967 = vset.pattern.permute.xlu0 %v965
    %968 = vperm.xlu0 %967, %v963
    %v969 = vpop.permute.xlu0 %968
    %v970 = vperm.slane %v82, 7
    %v971 = vlaneseq
    %v972 = vshrl.u32 %v971, 7
    %974 = vset.pattern.permute.xlu0 %v972
    %975 = vperm.xlu0 %974, %v970
    %v976 = vpop.permute.xlu0 %975
    %v977 = vperm.slane %v83, 0
    %v978 = vlaneseq
    %v979 = vshrl.u32 %v978, 7
    %981 = vset.pattern.permute.xlu0 %v979
    %982 = vperm.xlu0 %981, %v977
    %v983 = vpop.permute.xlu0 %982
    %v984 = vperm.slane %v83, 1
    %v985 = vlaneseq
    %v986 = vshrl.u32 %v985, 7
    %988 = vset.pattern.permute.xlu0 %v986
    %989 = vperm.xlu0 %988, %v984
    %v990 = vpop.permute.xlu0 %989
    %v991 = vperm.slane %v83, 2
    %v992 = vlaneseq
    %v993 = vshrl.u32 %v992, 7
    %995 = vset.pattern.permute.xlu0 %v993
    %996 = vperm.xlu0 %995, %v991
    %v997 = vpop.permute.xlu0 %996
    %v998 = vperm.slane %v83, 3
    %v999 = vlaneseq
    %v1000 = vshrl.u32 %v999, 7
    %1002 = vset.pattern.permute.xlu0 %v1000
    %1003 = vperm.xlu0 %1002, %v998
    %v1004 = vpop.permute.xlu0 %1003
    %v1005 = vperm.slane %v83, 4
    %v1006 = vlaneseq
    %v1007 = vshrl.u32 %v1006, 7
    %1009 = vset.pattern.permute.xlu0 %v1007
    %1010 = vperm.xlu0 %1009, %v1005
    %v1011 = vpop.permute.xlu0 %1010
    %v1012 = vperm.slane %v83, 5
    %v1013 = vlaneseq
    %v1014 = vshrl.u32 %v1013, 7
    %1016 = vset.pattern.permute.xlu0 %v1014
    %1017 = vperm.xlu0 %1016, %v1012
    %v1018 = vpop.permute.xlu0 %1017
    %v1019 = vperm.slane %v83, 6
    %v1020 = vlaneseq
    %v1021 = vshrl.u32 %v1020, 7
    %1023 = vset.pattern.permute.xlu0 %v1021
    %1024 = vperm.xlu0 %1023, %v1019
    %v1025 = vpop.permute.xlu0 %1024
    %v1026 = vperm.slane %v83, 7
    %v1027 = vlaneseq
    %v1028 = vshrl.u32 %v1027, 7
    %1030 = vset.pattern.permute.xlu0 %v1028
    %1031 = vperm.xlu0 %1030, %v1026
    %v1032 = vpop.permute.xlu0 %1031
    %v1065 = vmul.f32 %v803, %v815
    %v1066 = vmul.f32 %v803, %v822
    %v1067 = vmul.f32 %v803, %v829
    %v1068 = vmul.f32 %v803, %v836
    %v1069 = vmul.f32 %v803, %v843
    %v1070 = vmul.f32 %v803, %v850
    %v1071 = vmul.f32 %v803, %v857
    %v1072 = vmul.f32 %v803, %v864
    %v1073 = vmul.f32 %v803, %v871
    %v1074 = vmul.f32 %v803, %v878
    %v1075 = vmul.f32 %v803, %v885
    %v1076 = vmul.f32 %v803, %v892
    %v1077 = vmul.f32 %v803, %v899
    %v1078 = vmul.f32 %v803, %v906
    %v1079 = vmul.f32 %v803, %v913
    %v1080 = vmul.f32 %v803, %v920
    %v1081 = vmul.f32 %v803, %v927
    %v1082 = vmul.f32 %v803, %v934
    %v1083 = vmul.f32 %v803, %v941
    %v1084 = vmul.f32 %v803, %v948
    %v1085 = vmul.f32 %v803, %v955
    %v1086 = vmul.f32 %v803, %v962
    %v1087 = vmul.f32 %v803, %v969
    %v1088 = vmul.f32 %v803, %v976
    %v1089 = vmul.f32 %v803, %v983
    %v1090 = vmul.f32 %v803, %v990
    %v1091 = vmul.f32 %v803, %v997
    %v1092 = vmul.f32 %v803, %v1004
    %v1093 = vmul.f32 %v803, %v1011
    %v1094 = vmul.f32 %v803, %v1018
    %v1095 = vmul.f32 %v803, %v1025
    %v1096 = vmul.f32 %v803, %v1032
    %v1097 = vmul.f32 %v804, %v815
    %v1098 = vmul.f32 %v804, %v822
    %v1099 = vmul.f32 %v804, %v829
    %v1100 = vmul.f32 %v804, %v836
    %v1101 = vmul.f32 %v804, %v843
    %v1102 = vmul.f32 %v804, %v850
    %v1103 = vmul.f32 %v804, %v857
    %v1104 = vmul.f32 %v804, %v864
    %v1105 = vmul.f32 %v804, %v871
    %v1106 = vmul.f32 %v804, %v878
    %v1107 = vmul.f32 %v804, %v885
    %v1108 = vmul.f32 %v804, %v892
    %v1109 = vmul.f32 %v804, %v899
    %v1110 = vmul.f32 %v804, %v906
    %v1111 = vmul.f32 %v804, %v913
    %v1112 = vmul.f32 %v804, %v920
    %v1113 = vmul.f32 %v804, %v927
    %v1114 = vmul.f32 %v804, %v934
    %v1115 = vmul.f32 %v804, %v941
    %v1116 = vmul.f32 %v804, %v948
    %v1117 = vmul.f32 %v804, %v955
    %v1118 = vmul.f32 %v804, %v962
    %v1119 = vmul.f32 %v804, %v969
    %v1120 = vmul.f32 %v804, %v976
    %v1121 = vmul.f32 %v804, %v983
    %v1122 = vmul.f32 %v804, %v990
    %v1123 = vmul.f32 %v804, %v997
    %v1124 = vmul.f32 %v804, %v1004
    %v1125 = vmul.f32 %v804, %v1011
    %v1126 = vmul.f32 %v804, %v1018
    %v1127 = vmul.f32 %v804, %v1025
    %v1128 = vmul.f32 %v804, %v1032
    %1193 = vset.pattern.permute.xlu0 0
    %1194 = vperm.xlu0 %1193, %v1065
    %v1195 = vpop.permute.xlu0 %1194
    %1196 = vset.pattern.permute.xlu0 0
    %1197 = vperm.xlu0 %1196, %v1066
    %v1198 = vpop.permute.xlu0 %1197
    %1199 = vset.pattern.permute.xlu0 0
    %1200 = vperm.xlu0 %1199, %v1067
    %v1201 = vpop.permute.xlu0 %1200
    %1202 = vset.pattern.permute.xlu0 0
    %1203 = vperm.xlu0 %1202, %v1068
    %v1204 = vpop.permute.xlu0 %1203
    %1205 = vset.pattern.permute.xlu0 0
    %1206 = vperm.xlu0 %1205, %v1069
    %v1207 = vpop.permute.xlu0 %1206
    %1208 = vset.pattern.permute.xlu0 0
    %1209 = vperm.xlu0 %1208, %v1070
    %v1210 = vpop.permute.xlu0 %1209
    %1211 = vset.pattern.permute.xlu0 0
    %1212 = vperm.xlu0 %1211, %v1071
    %v1213 = vpop.permute.xlu0 %1212
    %1214 = vset.pattern.permute.xlu0 0
    %1215 = vperm.xlu0 %1214, %v1072
    %v1216 = vpop.permute.xlu0 %1215
    %1217 = vset.pattern.permute.xlu0 0
    %1218 = vperm.xlu0 %1217, %v1073
    %v1219 = vpop.permute.xlu0 %1218
    %1220 = vset.pattern.permute.xlu0 0
    %1221 = vperm.xlu0 %1220, %v1074
    %v1222 = vpop.permute.xlu0 %1221
    %1223 = vset.pattern.permute.xlu0 0
    %1224 = vperm.xlu0 %1223, %v1075
    %v1225 = vpop.permute.xlu0 %1224
    %1226 = vset.pattern.permute.xlu0 0
    %1227 = vperm.xlu0 %1226, %v1076
    %v1228 = vpop.permute.xlu0 %1227
    %1229 = vset.pattern.permute.xlu0 0
    %1230 = vperm.xlu0 %1229, %v1077
    %v1231 = vpop.permute.xlu0 %1230
    %1232 = vset.pattern.permute.xlu0 0
    %1233 = vperm.xlu0 %1232, %v1078
    %v1234 = vpop.permute.xlu0 %1233
    %1235 = vset.pattern.permute.xlu0 0
    %1236 = vperm.xlu0 %1235, %v1079
    %v1237 = vpop.permute.xlu0 %1236
    %1238 = vset.pattern.permute.xlu0 0
    %1239 = vperm.xlu0 %1238, %v1080
    %v1240 = vpop.permute.xlu0 %1239
    %1241 = vset.pattern.permute.xlu0 0
    %1242 = vperm.xlu0 %1241, %v1081
    %v1243 = vpop.permute.xlu0 %1242
    %1244 = vset.pattern.permute.xlu0 0
    %1245 = vperm.xlu0 %1244, %v1082
    %v1246 = vpop.permute.xlu0 %1245
    %1247 = vset.pattern.permute.xlu0 0
    %1248 = vperm.xlu0 %1247, %v1083
    %v1249 = vpop.permute.xlu0 %1248
    %1250 = vset.pattern.permute.xlu0 0
    %1251 = vperm.xlu0 %1250, %v1084
    %v1252 = vpop.permute.xlu0 %1251
    %1253 = vset.pattern.permute.xlu0 0
    %1254 = vperm.xlu0 %1253, %v1085
    %v1255 = vpop.permute.xlu0 %1254
    %1256 = vset.pattern.permute.xlu0 0
    %1257 = vperm.xlu0 %1256, %v1086
    %v1258 = vpop.permute.xlu0 %1257
    %1259 = vset.pattern.permute.xlu0 0
    %1260 = vperm.xlu0 %1259, %v1087
    %v1261 = vpop.permute.xlu0 %1260
    %1262 = vset.pattern.permute.xlu0 0
    %1263 = vperm.xlu0 %1262, %v1088
    %v1264 = vpop.permute.xlu0 %1263
    %1265 = vset.pattern.permute.xlu0 0
    %1266 = vperm.xlu0 %1265, %v1089
    %v1267 = vpop.permute.xlu0 %1266
    %1268 = vset.pattern.permute.xlu0 0
    %1269 = vperm.xlu0 %1268, %v1090
    %v1270 = vpop.permute.xlu0 %1269
    %1271 = vset.pattern.permute.xlu0 0
    %1272 = vperm.xlu0 %1271, %v1091
    %v1273 = vpop.permute.xlu0 %1272
    %1274 = vset.pattern.permute.xlu0 0
    %1275 = vperm.xlu0 %1274, %v1092
    %v1276 = vpop.permute.xlu0 %1275
    %1277 = vset.pattern.permute.xlu0 0
    %1278 = vperm.xlu0 %1277, %v1093
    %v1279 = vpop.permute.xlu0 %1278
    %1280 = vset.pattern.permute.xlu0 0
    %1281 = vperm.xlu0 %1280, %v1094
    %v1282 = vpop.permute.xlu0 %1281
    %1283 = vset.pattern.permute.xlu0 0
    %1284 = vperm.xlu0 %1283, %v1095
    %v1285 = vpop.permute.xlu0 %1284
    %1286 = vset.pattern.permute.xlu0 0
    %1287 = vperm.xlu0 %1286, %v1096
    %v1288 = vpop.permute.xlu0 %1287
    %1289 = vset.pattern.permute.xlu0 0
    %1290 = vperm.xlu0 %1289, %v1097
    %v1291 = vpop.permute.xlu0 %1290
    %1292 = vset.pattern.permute.xlu0 0
    %1293 = vperm.xlu0 %1292, %v1098
    %v1294 = vpop.permute.xlu0 %1293
    %1295 = vset.pattern.permute.xlu0 0
    %1296 = vperm.xlu0 %1295, %v1099
    %v1297 = vpop.permute.xlu0 %1296
    %1298 = vset.pattern.permute.xlu0 0
    %1299 = vperm.xlu0 %1298, %v1100
    %v1300 = vpop.permute.xlu0 %1299
    %1301 = vset.pattern.permute.xlu0 0
    %1302 = vperm.xlu0 %1301, %v1101
    %v1303 = vpop.permute.xlu0 %1302
    %1304 = vset.pattern.permute.xlu0 0
    %1305 = vperm.xlu0 %1304, %v1102
    %v1306 = vpop.permute.xlu0 %1305
    %1307 = vset.pattern.permute.xlu0 0
    %1308 = vperm.xlu0 %1307, %v1103
    %v1309 = vpop.permute.xlu0 %1308
    %1310 = vset.pattern.permute.xlu0 0
    %1311 = vperm.xlu0 %1310, %v1104
    %v1312 = vpop.permute.xlu0 %1311
    %1313 = vset.pattern.permute.xlu0 0
    %1314 = vperm.xlu0 %1313, %v1105
    %v1315 = vpop.permute.xlu0 %1314
    %1316 = vset.pattern.permute.xlu0 0
    %1317 = vperm.xlu0 %1316, %v1106
    %v1318 = vpop.permute.xlu0 %1317
    %1319 = vset.pattern.permute.xlu0 0
    %1320 = vperm.xlu0 %1319, %v1107
    %v1321 = vpop.permute.xlu0 %1320
    %1322 = vset.pattern.permute.xlu0 0
    %1323 = vperm.xlu0 %1322, %v1108
    %v1324 = vpop.permute.xlu0 %1323
    %1325 = vset.pattern.permute.xlu0 0
    %1326 = vperm.xlu0 %1325, %v1109
    %v1327 = vpop.permute.xlu0 %1326
    %1328 = vset.pattern.permute.xlu0 0
    %1329 = vperm.xlu0 %1328, %v1110
    %v1330 = vpop.permute.xlu0 %1329
    %1331 = vset.pattern.permute.xlu0 0
    %1332 = vperm.xlu0 %1331, %v1111
    %v1333 = vpop.permute.xlu0 %1332
    %1334 = vset.pattern.permute.xlu0 0
    %1335 = vperm.xlu0 %1334, %v1112
    %v1336 = vpop.permute.xlu0 %1335
    %1337 = vset.pattern.permute.xlu0 0
    %1338 = vperm.xlu0 %1337, %v1113
    %v1339 = vpop.permute.xlu0 %1338
    %1340 = vset.pattern.permute.xlu0 0
    %1341 = vperm.xlu0 %1340, %v1114
    %v1342 = vpop.permute.xlu0 %1341
    %1343 = vset.pattern.permute.xlu0 0
    %1344 = vperm.xlu0 %1343, %v1115
    %v1345 = vpop.permute.xlu0 %1344
    %1346 = vset.pattern.permute.xlu0 0
    %1347 = vperm.xlu0 %1346, %v1116
    %v1348 = vpop.permute.xlu0 %1347
    %1349 = vset.pattern.permute.xlu0 0
    %1350 = vperm.xlu0 %1349, %v1117
    %v1351 = vpop.permute.xlu0 %1350
    %1352 = vset.pattern.permute.xlu0 0
    %1353 = vperm.xlu0 %1352, %v1118
    %v1354 = vpop.permute.xlu0 %1353
    %1355 = vset.pattern.permute.xlu0 0
    %1356 = vperm.xlu0 %1355, %v1119
    %v1357 = vpop.permute.xlu0 %1356
    %1358 = vset.pattern.permute.xlu0 0
    %1359 = vperm.xlu0 %1358, %v1120
    %v1360 = vpop.permute.xlu0 %1359
    %1361 = vset.pattern.permute.xlu0 0
    %1362 = vperm.xlu0 %1361, %v1121
    %v1363 = vpop.permute.xlu0 %1362
    %1364 = vset.pattern.permute.xlu0 0
    %1365 = vperm.xlu0 %1364, %v1122
    %v1366 = vpop.permute.xlu0 %1365
    %1367 = vset.pattern.permute.xlu0 0
    %1368 = vperm.xlu0 %1367, %v1123
    %v1369 = vpop.permute.xlu0 %1368
    %1370 = vset.pattern.permute.xlu0 0
    %1371 = vperm.xlu0 %1370, %v1124
    %v1372 = vpop.permute.xlu0 %1371
    %1373 = vset.pattern.permute.xlu0 0
    %1374 = vperm.xlu0 %1373, %v1125
    %v1375 = vpop.permute.xlu0 %1374
    %1376 = vset.pattern.permute.xlu0 0
    %1377 = vperm.xlu0 %1376, %v1126
    %v1378 = vpop.permute.xlu0 %1377
    %1379 = vset.pattern.permute.xlu0 0
    %1380 = vperm.xlu0 %1379, %v1127
    %v1381 = vpop.permute.xlu0 %1380
    %1382 = vset.pattern.permute.xlu0 0
    %1383 = vperm.xlu0 %1382, %v1128
    %v1384 = vpop.permute.xlu0 %1383
    %v1385 = vperm.slane %v1195, %v638
    %v1386 = vperm.slane %v1198, %v638
    %v1387 = vperm.slane %v1201, %v638
    %v1388 = vperm.slane %v1204, %v638
    %v1389 = vperm.slane %v1207, %v638
    %v1390 = vperm.slane %v1210, %v638
    %v1391 = vperm.slane %v1213, %v638
    %v1392 = vperm.slane %v1216, %v638
    %v1393 = vperm.slane %v1219, %v638
    %v1394 = vperm.slane %v1222, %v638
    %v1395 = vperm.slane %v1225, %v638
    %v1396 = vperm.slane %v1228, %v638
    %v1397 = vperm.slane %v1231, %v638
    %v1398 = vperm.slane %v1234, %v638
    %v1399 = vperm.slane %v1237, %v638
    %v1400 = vperm.slane %v1240, %v638
    %v1401 = vperm.slane %v1243, %v638
    %v1402 = vperm.slane %v1246, %v638
    %v1403 = vperm.slane %v1249, %v638
    %v1404 = vperm.slane %v1252, %v638
    %v1405 = vperm.slane %v1255, %v638
    %v1406 = vperm.slane %v1258, %v638
    %v1407 = vperm.slane %v1261, %v638
    %v1408 = vperm.slane %v1264, %v638
    %v1409 = vperm.slane %v1267, %v638
    %v1410 = vperm.slane %v1270, %v638
    %v1411 = vperm.slane %v1273, %v638
    %v1412 = vperm.slane %v1276, %v638
    %v1413 = vperm.slane %v1279, %v638
    %v1414 = vperm.slane %v1282, %v638
    %v1415 = vperm.slane %v1285, %v638
    %v1416 = vperm.slane %v1288, %v638
    %v1417 = vperm.slane %v1291, %v638
    %v1418 = vperm.slane %v1294, %v638
    %v1419 = vperm.slane %v1297, %v638
    %v1420 = vperm.slane %v1300, %v638
    %v1421 = vperm.slane %v1303, %v638
    %v1422 = vperm.slane %v1306, %v638
    %v1423 = vperm.slane %v1309, %v638
    %v1424 = vperm.slane %v1312, %v638
    %v1425 = vperm.slane %v1315, %v638
    %v1426 = vperm.slane %v1318, %v638
    %v1427 = vperm.slane %v1321, %v638
    %v1428 = vperm.slane %v1324, %v638
    %v1429 = vperm.slane %v1327, %v638
    %v1430 = vperm.slane %v1330, %v638
    %v1431 = vperm.slane %v1333, %v638
    %v1432 = vperm.slane %v1336, %v638
    %v1433 = vperm.slane %v1339, %v638
    %v1434 = vperm.slane %v1342, %v638
    %v1435 = vperm.slane %v1345, %v638
    %v1436 = vperm.slane %v1348, %v638
    %v1437 = vperm.slane %v1351, %v638
    %v1438 = vperm.slane %v1354, %v638
    %v1439 = vperm.slane %v1357, %v638
    %v1440 = vperm.slane %v1360, %v638
    %v1441 = vperm.slane %v1363, %v638
    %v1442 = vperm.slane %v1366, %v638
    %v1443 = vperm.slane %v1369, %v638
    %v1444 = vperm.slane %v1372, %v638
    %v1445 = vperm.slane %v1375, %v638
    %v1446 = vperm.slane %v1378, %v638
    %v1447 = vperm.slane %v1381, %v638
    %v1448 = vperm.slane %v1384, %v638
    %v1449 = vsel %vm757, %v1386, %v1385
    %v1450 = vsel %vm759, %v1387, %v1449
    %v1451 = vsel %vm761, %v1388, %v1450
    %v1452 = vsel %vm763, %v1389, %v1451
    %v1453 = vsel %vm765, %v1390, %v1452
    %v1454 = vsel %vm767, %v1391, %v1453
    %v1455 = vsel %vm769, %v1392, %v1454
    %v1456 = vsel %vm757, %v1394, %v1393
    %v1457 = vsel %vm759, %v1395, %v1456
    %v1458 = vsel %vm761, %v1396, %v1457
    %v1459 = vsel %vm763, %v1397, %v1458
    %v1460 = vsel %vm765, %v1398, %v1459
    %v1461 = vsel %vm767, %v1399, %v1460
    %v1462 = vsel %vm769, %v1400, %v1461
    %v1463 = vsel %vm757, %v1402, %v1401
    %v1464 = vsel %vm759, %v1403, %v1463
    %v1465 = vsel %vm761, %v1404, %v1464
    %v1466 = vsel %vm763, %v1405, %v1465
    %v1467 = vsel %vm765, %v1406, %v1466
    %v1468 = vsel %vm767, %v1407, %v1467
    %v1469 = vsel %vm769, %v1408, %v1468
    %v1470 = vsel %vm757, %v1410, %v1409
    %v1471 = vsel %vm759, %v1411, %v1470
    %v1472 = vsel %vm761, %v1412, %v1471
    %v1473 = vsel %vm763, %v1413, %v1472
    %v1474 = vsel %vm765, %v1414, %v1473
    %v1475 = vsel %vm767, %v1415, %v1474
    %v1476 = vsel %vm769, %v1416, %v1475
    %v1477 = vsel %vm757, %v1418, %v1417
    %v1478 = vsel %vm759, %v1419, %v1477
    %v1479 = vsel %vm761, %v1420, %v1478
    %v1480 = vsel %vm763, %v1421, %v1479
    %v1481 = vsel %vm765, %v1422, %v1480
    %v1482 = vsel %vm767, %v1423, %v1481
    %v1483 = vsel %vm769, %v1424, %v1482
    %v1484 = vsel %vm757, %v1426, %v1425
    %v1485 = vsel %vm759, %v1427, %v1484
    %v1486 = vsel %vm761, %v1428, %v1485
    %v1487 = vsel %vm763, %v1429, %v1486
    %v1488 = vsel %vm765, %v1430, %v1487
    %v1489 = vsel %vm767, %v1431, %v1488
    %v1490 = vsel %vm769, %v1432, %v1489
    %v1491 = vsel %vm757, %v1434, %v1433
    %v1492 = vsel %vm759, %v1435, %v1491
    %v1493 = vsel %vm761, %v1436, %v1492
    %v1494 = vsel %vm763, %v1437, %v1493
    %v1495 = vsel %vm765, %v1438, %v1494
    %v1496 = vsel %vm767, %v1439, %v1495
    %v1497 = vsel %vm769, %v1440, %v1496
    %v1498 = vsel %vm757, %v1442, %v1441
    %v1499 = vsel %vm759, %v1443, %v1498
    %v1500 = vsel %vm761, %v1444, %v1499
    %v1501 = vsel %vm763, %v1445, %v1500
    %v1502 = vsel %vm765, %v1446, %v1501
    %v1503 = vsel %vm767, %v1447, %v1502
    %v1504 = vsel %vm769, %v1448, %v1503
    %vm1513 = vcmask 64512
    %v1514 = vsel %vm1513, %v1455, 0.0
    %1515 = vadd.xlane.f32.xlu0 %v1514
    %v1516 = vpop.xlane.xlu0 %1515
    %v1517 = vsel %vm1513, %v1462, 0.0
    %1518 = vadd.xlane.f32.xlu0 %v1517
    %v1519 = vpop.xlane.xlu0 %1518
    %v1520 = vsel %vm1513, %v1469, 0.0
    %1521 = vadd.xlane.f32.xlu0 %v1520
    %v1522 = vpop.xlane.xlu0 %1521
    %v1523 = vsel %vm1513, %v1476, 0.0
    %1524 = vadd.xlane.f32.xlu0 %v1523
    %v1525 = vpop.xlane.xlu0 %1524
    %v1526 = vsel %vm1513, %v1483, 0.0
    %1527 = vadd.xlane.f32.xlu0 %v1526
    %v1528 = vpop.xlane.xlu0 %1527
    %v1529 = vsel %vm1513, %v1490, 0.0
    %1530 = vadd.xlane.f32.xlu0 %v1529
    %v1531 = vpop.xlane.xlu0 %1530
    %v1532 = vsel %vm1513, %v1497, 0.0
    %1533 = vadd.xlane.f32.xlu0 %v1532
    %v1534 = vpop.xlane.xlu0 %1533
    %v1535 = vsel %vm1513, %v1504, 0.0
    %1536 = vadd.xlane.f32.xlu0 %v1535
    %v1537 = vpop.xlane.xlu0 %1536
    %v1538 = vxor.u32 %v1516, 2147483648
    %v1539 = vxor.u32 %v1519, 2147483648
    %v1540 = vxor.u32 %v1522, 2147483648
    %v1541 = vxor.u32 %v1525, 2147483648
    %v1542 = vxor.u32 %v1528, 2147483648
    %v1543 = vxor.u32 %v1531, 2147483648
    %v1544 = vxor.u32 %v1534, 2147483648
    %v1545 = vxor.u32 %v1537, 2147483648
    %v1546 = vmul.f32 %v1538, 1.442695
    %v1547 = vpow.pop %v1546
    %v1548 = vmul.f32 %v1539, 1.442695
    %v1549 = vpow.pop %v1548
    %v1550 = vmul.f32 %v1540, 1.442695
    %v1551 = vpow.pop %v1550
    %v1552 = vmul.f32 %v1541, 1.442695
    %v1553 = vpow.pop %v1552
    %v1554 = vmul.f32 %v1542, 1.442695
    %v1555 = vpow.pop %v1554
    %v1556 = vmul.f32 %v1543, 1.442695
    %v1557 = vpow.pop %v1556
    %v1558 = vmul.f32 %v1544, 1.442695
    %v1559 = vpow.pop %v1558
    %v1560 = vmul.f32 %v1545, 1.442695
    %v1561 = vpow.pop %v1560
    %v1562 = vadd.f32 %v1547, 1.0
    %v1563 = vadd.f32 %v1549, 1.0
    %v1564 = vadd.f32 %v1551, 1.0
    %v1565 = vadd.f32 %v1553, 1.0
    %v1566 = vadd.f32 %v1555, 1.0
    %v1567 = vadd.f32 %v1557, 1.0
    %v1568 = vadd.f32 %v1559, 1.0
    %v1569 = vadd.f32 %v1561, 1.0
    %v1570 = vrcp.pop %v1562
    %v1571 = vmul.f32 %v1562, %v1570
    %v1572 = vsub.f32 1.0, %v1571
    %v1573 = vmul.f32 %v1570, %v1572
    %v1574 = vadd.f32 %v1570, %v1573
    %vm1575 = vweird.f32 %v1562
    %vm1576 = vweird.f32 %v1570
    %vm1577 = vmor %vm1575, %vm1576
    %v1578 = vsel %vm1577, %v1570, %v1574
    %v1579 = vand.u32 2147483647, %v1562
    %vm1580 = vcmp.eq.f32.partialorder %v1579, 8.507059e+37
    %v1581 = vand.u32 %v1562, 2147483648
    %v1582 = vor.u32 1.1754944e-38, %v1581
    %v1583 = vsel %vm1580, %v1582, %v1578
    %v1584 = vmul.f32 1.0, %v1583
    %v1585 = vrcp.pop %v1563
    %v1586 = vmul.f32 %v1563, %v1585
    %v1587 = vsub.f32 1.0, %v1586
    %v1588 = vmul.f32 %v1585, %v1587
    %v1589 = vadd.f32 %v1585, %v1588
    %vm1590 = vweird.f32 %v1563
    %vm1591 = vweird.f32 %v1585
    %vm1592 = vmor %vm1590, %vm1591
    %v1593 = vsel %vm1592, %v1585, %v1589
    %v1594 = vand.u32 2147483647, %v1563
    %vm1595 = vcmp.eq.f32.partialorder %v1594, 8.507059e+37
    %v1596 = vand.u32 %v1563, 2147483648
    %v1597 = vor.u32 1.1754944e-38, %v1596
    %v1598 = vsel %vm1595, %v1597, %v1593
    %v1599 = vmul.f32 1.0, %v1598
    %v1600 = vrcp.pop %v1564
    %v1601 = vmul.f32 %v1564, %v1600
    %v1602 = vsub.f32 1.0, %v1601
    %v1603 = vmul.f32 %v1600, %v1602
    %v1604 = vadd.f32 %v1600, %v1603
    %vm1605 = vweird.f32 %v1564
    %vm1606 = vweird.f32 %v1600
    %vm1607 = vmor %vm1605, %vm1606
    %v1608 = vsel %vm1607, %v1600, %v1604
    %v1609 = vand.u32 2147483647, %v1564
    %vm1610 = vcmp.eq.f32.partialorder %v1609, 8.507059e+37
    %v1611 = vand.u32 %v1564, 2147483648
    %v1612 = vor.u32 1.1754944e-38, %v1611
    %v1613 = vsel %vm1610, %v1612, %v1608
    %v1614 = vmul.f32 1.0, %v1613
    %v1615 = vrcp.pop %v1565
    %v1616 = vmul.f32 %v1565, %v1615
    %v1617 = vsub.f32 1.0, %v1616
    %v1618 = vmul.f32 %v1615, %v1617
    %v1619 = vadd.f32 %v1615, %v1618
    %vm1620 = vweird.f32 %v1565
    %vm1621 = vweird.f32 %v1615
    %vm1622 = vmor %vm1620, %vm1621
    %v1623 = vsel %vm1622, %v1615, %v1619
    %v1624 = vand.u32 2147483647, %v1565
    %vm1625 = vcmp.eq.f32.partialorder %v1624, 8.507059e+37
    %v1626 = vand.u32 %v1565, 2147483648
    %v1627 = vor.u32 1.1754944e-38, %v1626
    %v1628 = vsel %vm1625, %v1627, %v1623
    %v1629 = vmul.f32 1.0, %v1628
    %v1630 = vrcp.pop %v1566
    %v1631 = vmul.f32 %v1566, %v1630
    %v1632 = vsub.f32 1.0, %v1631
    %v1633 = vmul.f32 %v1630, %v1632
    %v1634 = vadd.f32 %v1630, %v1633
    %vm1635 = vweird.f32 %v1566
    %vm1636 = vweird.f32 %v1630
    %vm1637 = vmor %vm1635, %vm1636
    %v1638 = vsel %vm1637, %v1630, %v1634
    %v1639 = vand.u32 2147483647, %v1566
    %vm1640 = vcmp.eq.f32.partialorder %v1639, 8.507059e+37
    %v1641 = vand.u32 %v1566, 2147483648
    %v1642 = vor.u32 1.1754944e-38, %v1641
    %v1643 = vsel %vm1640, %v1642, %v1638
    %v1644 = vmul.f32 1.0, %v1643
    %v1645 = vrcp.pop %v1567
    %v1646 = vmul.f32 %v1567, %v1645
    %v1647 = vsub.f32 1.0, %v1646
    %v1648 = vmul.f32 %v1645, %v1647
    %v1649 = vadd.f32 %v1645, %v1648
    %vm1650 = vweird.f32 %v1567
    %vm1651 = vweird.f32 %v1645
    %vm1652 = vmor %vm1650, %vm1651
    %v1653 = vsel %vm1652, %v1645, %v1649
    %v1654 = vand.u32 2147483647, %v1567
    %vm1655 = vcmp.eq.f32.partialorder %v1654, 8.507059e+37
    %v1656 = vand.u32 %v1567, 2147483648
    %v1657 = vor.u32 1.1754944e-38, %v1656
    %v1658 = vsel %vm1655, %v1657, %v1653
    %v1659 = vmul.f32 1.0, %v1658
    %v1660 = vrcp.pop %v1568
    %v1661 = vmul.f32 %v1568, %v1660
    %v1662 = vsub.f32 1.0, %v1661
    %v1663 = vmul.f32 %v1660, %v1662
    %v1664 = vadd.f32 %v1660, %v1663
    %vm1665 = vweird.f32 %v1568
    %vm1666 = vweird.f32 %v1660
    %vm1667 = vmor %vm1665, %vm1666
    %v1668 = vsel %vm1667, %v1660, %v1664
    %v1669 = vand.u32 2147483647, %v1568
    %vm1670 = vcmp.eq.f32.partialorder %v1669, 8.507059e+37
    %v1671 = vand.u32 %v1568, 2147483648
    %v1672 = vor.u32 1.1754944e-38, %v1671
    %v1673 = vsel %vm1670, %v1672, %v1668
    %v1674 = vmul.f32 1.0, %v1673
    %v1675 = vrcp.pop %v1569
    %v1676 = vmul.f32 %v1569, %v1675
    %v1677 = vsub.f32 1.0, %v1676
    %v1678 = vmul.f32 %v1675, %v1677
    %v1679 = vadd.f32 %v1675, %v1678
    %vm1680 = vweird.f32 %v1569
    %vm1681 = vweird.f32 %v1675
    %vm1682 = vmor %vm1680, %vm1681
    %v1683 = vsel %vm1682, %v1675, %v1679
    %v1684 = vand.u32 2147483647, %v1569
    %vm1685 = vcmp.eq.f32.partialorder %v1684, 8.507059e+37
    %v1686 = vand.u32 %v1569, 2147483648
    %v1687 = vor.u32 1.1754944e-38, %v1686
    %v1688 = vsel %vm1685, %v1687, %v1683
    %v1689 = vmul.f32 1.0, %v1688
    %v1690 = vmul.f32 %v31, %v1584
    %v1691 = vmul.f32 %v32, %v1584
    %v1692 = vmul.f32 %v33, %v1599
    %v1693 = vmul.f32 %v34, %v1599
    %v1694 = vmul.f32 %v35, %v1614
    %v1695 = vmul.f32 %v36, %v1614
    %v1696 = vmul.f32 %v37, %v1629
    %v1697 = vmul.f32 %v38, %v1629
    %v1698 = vmul.f32 %v39, %v1644
    %v1699 = vmul.f32 %v40, %v1644
    %v1700 = vmul.f32 %v41, %v1659
    %v1701 = vmul.f32 %v42, %v1659
    %v1702 = vmul.f32 %v43, %v1674
    %v1703 = vmul.f32 %v44, %v1674
    %v1704 = vmul.f32 %v45, %v1689
    %v1705 = vmul.f32 %v46, %v1689
    %1706 = vst [vmem:[#allocation5] sm:$0xff] %v1690
    %1707 = vst [vmem:[#allocation5 + $0x8] sm:$0xff] %v1691
    %1708 = vst [vmem:[#allocation5 + $0x10] sm:$0xff] %v1692
    %1709 = vst [vmem:[#allocation5 + $0x18] sm:$0xff] %v1693
    %1710 = vst [vmem:[#allocation5 + $0x20] sm:$0xff] %v1694
    %1711 = vst [vmem:[#allocation5 + $0x28] sm:$0xff] %v1695
    %1712 = vst [vmem:[#allocation5 + $0x30] sm:$0xff] %v1696
    %1713 = vst [vmem:[#allocation5 + $0x38] sm:$0xff] %v1697
    %1714 = vst [vmem:[#allocation5 + $0x40] sm:$0xff] %v1698
    %1715 = vst [vmem:[#allocation5 + $0x48] sm:$0xff] %v1699
    %1716 = vst [vmem:[#allocation5 + $0x50] sm:$0xff] %v1700
    %1717 = vst [vmem:[#allocation5 + $0x58] sm:$0xff] %v1701
    %1718 = vst [vmem:[#allocation5 + $0x60] sm:$0xff] %v1702
    %1719 = vst [vmem:[#allocation5 + $0x68] sm:$0xff] %v1703
    %1720 = vst [vmem:[#allocation5 + $0x70] sm:$0xff] %v1704
    %1721 = vst [vmem:[#allocation5 + $0x78] sm:$0xff] %v1705
    // Predicated region
    $region18: #{tpu_custom_call.1} parent=1 // pred_check
      _
    $region19: #{tpu_custom_call.1} parent=1 // pred_check_branch
      %1723 = sbr.rel (0) target = $region21
    $region20: #{tpu_custom_call.1} parent=1 // pred_region
      %1725 = vsyncadd [#allocation4], 0
      %s1726 = sshll.u32 [#allocation5], 4
      %s1727 = int_to_ptr.vmem [resolvable:$true] %s1726
      %s1728 = sshll.u32 %s3, 4
      %s1729 = int_to_ptr.hbm [resolvable:$true] %s1728
      %1734 = dma.vmem_to_hbm [thread:$0]  %s1727, 2048, %s1729, [#allocation4], 256, 256, 16
    $region21: #{tpu_custom_call.1} parent=1 // pred_fallthru
      _
    // Predicated region
    $region22: #{tpu_custom_call.1} parent=1 // pred_check
      _
    $region23: #{tpu_custom_call.1} parent=1 // pred_check_branch
      %1736 = sbr.rel (0) target = $region25
    $region24: #{tpu_custom_call.1} parent=1 // pred_region
      %1738 = dma.done [#allocation4], 2048
    $region25: #{tpu_custom_call.1} parent=1 // pred_fallthru
      _
    %1739 = vsyncpa [#allocation3], 1
    %1740 = vsyncpa [#allocation4], 1

</llo_original>
